<compile_context>
chip_gen: v7x
topology: tpu7x:2x2x1
jax: 0.10.0
libtpu: 0.0.40
codegen_flags: <defaults>
</compile_context>

<pallas_src>
import jax
import jax.numpy as jnp
from jax.experimental import pallas as pl
from jax.experimental.pallas import tpu as pltpu

STATE_DIM = 1022
NUM_ACTIONS = 2
NUM_INPUTS = STATE_DIM + NUM_ACTIONS   # 1024
HIDDEN = 512
N_PAD = 128                            # lane-dense padded output width


def dpg_kernel(s_ref, pa_ref, w1a_ref, w1b_ref, b1_ref, w2_ref, b2_ref, out_ref):
    # In-kernel f32 -> bf16 cast of the state tile (no wrapper-side cast / extra HBM pass).
    s = s_ref[...].astype(jnp.bfloat16)                       # [TB, 1022] bf16
    # [TB, 1022](bf16) @ [1022, 512](bf16) -> f32 accumulate on the MXU.
    h = jnp.dot(s, w1a_ref[...], preferred_element_type=jnp.float32)
    # Fused concat: the 2 past-action columns contribute via two VPU broadcast-FMAs.
    pa = pa_ref[...]                                          # [TB, 2]  f32
    w1b = w1b_ref[...]                                        # [2, 512] f32
    h = h + pa[:, 0:1] * w1b[0:1, :] + pa[:, 1:2] * w1b[1:2, :]
    h = jnp.tanh(h + b1_ref[...])                             # f32 bias + tanh
    # Second matmul in bf16 (f32 accumulate): [TB,512] @ [512,128] -> lane-dense store.
    o = jnp.dot(h.astype(jnp.bfloat16), w2_ref[...],
                preferred_element_type=jnp.float32)
    out_ref[...] = (o + b2_ref[...]).astype(out_ref.dtype)    # f32 [TB, 128]


def prepare_params(w1, b1, w2, b2):
    """One-time weight preprocessing: split / cast / pad."""
    w1a = w1[:STATE_DIM, :].astype(jnp.bfloat16)                   # [1022, 512] bf16
    w1b = w1[STATE_DIM:, :].astype(jnp.float32)                    # [2, 512]    f32
    b1p = b1.reshape(1, HIDDEN).astype(jnp.float32)                # [1, 512]    f32
    w2p = jnp.zeros((HIDDEN, N_PAD), jnp.bfloat16).at[:, :NUM_ACTIONS].set(
        w2.astype(jnp.bfloat16))                                   # [512, 128]  bf16
    b2p = jnp.zeros((1, N_PAD), jnp.float32).at[:, :NUM_ACTIONS].set(
        b2.reshape(1, NUM_ACTIONS).astype(jnp.float32))            # [1, 128]    f32
    return w1a, w1b, b1p, w2p, b2p


def _choose_tile(batch):
    """Batch tile (rows): multiple of 8, <=1024, >=2 full tiles when batch > 256
    (so v7x can use both TensorCores), maximizing the number of rows covered by
    full tiles (exact divisors -> zero ragged tail); ties go to the larger tile
    (fewer ~0.35us grid steps)."""
    if batch <= 256:
        return batch                       # single full-extent tile
    best_tb, best_main = 128, 0
    for tb in range(128, 1025, 8):
        if batch // tb < 2:                # need >= 2 full tiles
            break
        main = (batch // tb) * tb
        if main > best_main or (main == best_main and tb > best_tb):
            best_tb, best_main = tb, main
    return best_tb


def _mlp_call(s, pa, w1a, w1b, b1p, w2p, b2p, tb, n_rows):
    """Run the MLP on the first `n_rows` rows of s / pa (n_rows % tb == 0).
    s / pa may have more rows; the grid simply never touches them (no slicing/copy)."""
    assert n_rows % tb == 0 and 0 < n_rows <= s.shape[0]
    resident = lambda i: (0, 0)   # constant index_map -> weights stay VMEM-resident
    return pl.pallas_call(
        dpg_kernel,
        out_shape=jax.ShapeDtypeStruct((n_rows, N_PAD), jnp.float32),
        grid=(n_rows // tb,),
        in_specs=[
            pl.BlockSpec((tb, STATE_DIM), lambda i: (i, 0)),     # f32 state tiles
            pl.BlockSpec((tb, NUM_ACTIONS), lambda i: (i, 0)),   # f32 past actions
            pl.BlockSpec((STATE_DIM, HIDDEN), resident),         # bf16 W1[:1022]
            pl.BlockSpec((NUM_ACTIONS, HIDDEN), resident),       # f32  W1[1022:]
            pl.BlockSpec((1, HIDDEN), resident),                 # f32  b1
            pl.BlockSpec((HIDDEN, N_PAD), resident),             # bf16 W2 (padded N)
            pl.BlockSpec((1, N_PAD), resident),                  # f32  b2 (padded N)
        ],
        out_specs=pl.BlockSpec((tb, N_PAD), lambda i: (i, 0)),
        compiler_params=pltpu.CompilerParams(
            # Independent batch tiles; v7x shards "parallel" grid axes over its 2 TCs.
            # TODO(synk): if "parallel" does not shard across v7x TensorCores on a
            #             given toolchain, switch this to pltpu.CORE_PARALLEL.
            dimension_semantics=("parallel",),
            # ~4 MiB x2 f32 state buffers at tb=1024 + ~2.5 MiB resident weights +
            # f32/bf16 intermediates; both limits leave headroom under v7x's 64 MiB/TC.
            vmem_limit_bytes=(24 if tb <= 512 else 40) * 1024 * 1024,
        ),
    )(s, pa, w1a, w1b, b1p, w2p, b2p)


def dpg_forward(state, past_actions, params):
    w1a, w1b, b1p, w2p, b2p = params
    B = state.shape[0]
    assert state.shape[1] == STATE_DIM and past_actions.shape[1] == NUM_ACTIONS
    pa = past_actions.astype(jnp.float32)        # no-op when already f32 ([B, 2] anyway)

    TB = _choose_tile(B)
    B_main = (B // TB) * TB

    # Main call: full TB-row tiles read straight from the unsliced arrays.
    out_main = _mlp_call(state, pa, w1a, w1b, b1p, w2p, b2p, TB, B_main)
    if B_main == B:
        return out_main[:, :NUM_ACTIONS]

    # Ragged tail (< TB rows): one extra single-tile (full-extent block) call on just
    # the tail rows — copies <= TB rows instead of jnp.pad-ing the whole batch.
    R = B - B_main
    out_tail = _mlp_call(state[B_main:], pa[B_main:], w1a, w1b, b1p, w2p, b2p, R, R)
    return jnp.concatenate(
        [out_main[:, :NUM_ACTIONS], out_tail[:, :NUM_ACTIONS]], axis=0)


def init_params(key):
    # nn.Linear default init: U(-1/sqrt(fan_in), 1/sqrt(fan_in)).
    k1, k2, k3, k4 = jax.random.split(key, 4)
    lim1 = 1.0 / (NUM_INPUTS ** 0.5)
    lim2 = 1.0 / (HIDDEN ** 0.5)
    w1 = jax.random.uniform(k1, (NUM_INPUTS, HIDDEN), jnp.float32, -lim1, lim1)
    b1 = jax.random.uniform(k2, (1, HIDDEN), jnp.float32, -lim1, lim1)
    w2 = jax.random.uniform(k3, (HIDDEN, NUM_ACTIONS), jnp.float32, -lim2, lim2)
    b2 = jax.random.uniform(k4, (1, NUM_ACTIONS), jnp.float32, -lim2, lim2)
    return w1, b1, w2, b2


def reference(state, past_actions, w1, b1, w2, b2):
    x = jnp.concatenate([state, past_actions], axis=1)
    return jnp.tanh(x @ w1 + b1) @ w2 + b2


def _check(out, ref, tag):
    # bf16 inputs to both matmuls (f32 accumulate) -> relaxed tolerance vs f32 reference.
    assert out.shape == ref.shape, (tag, out.shape, ref.shape)
    assert jnp.allclose(out, ref, atol=2e-2, rtol=1e-2), \
        (tag, float(jnp.max(jnp.abs(out - ref))))


if __name__ == "__main__":
    key = jax.random.PRNGKey(0)
    kp, ks, ka, ks2, ka2, ks3, ka3 = jax.random.split(key, 7)

    w1, b1, w2, b2 = init_params(kp)
    params = prepare_params(w1, b1, w2, b2)

    # Small shapes consistent with the module: batch=2, 1022 state features, 2 actions.
    B = 2
    state = jax.random.normal(ks, (B, STATE_DIM), jnp.float32)
    past_actions = jax.random.normal(ka, (B, NUM_ACTIONS), jnp.float32)
    out = dpg_forward(state, past_actions, params)
    jax.block_until_ready(out)
    _check(out, reference(state, past_actions, w1, b1, w2, b2), "B=2")

    # Multi-tile grid with an exact-divisor tile (B=600 -> TB=200, 3 full tiles, no pad).
    B2 = 600
    state2 = jax.random.normal(ks2, (B2, STATE_DIM), jnp.float32)
    past_actions2 = jax.random.normal(ka2, (B2, NUM_ACTIONS), jnp.float32)
    out2 = dpg_forward(state2, past_actions2, params)
    jax.block_until_ready(out2)
    _check(out2, reference(state2, past_actions2, w1, b1, w2, b2), "B=600")

    # Ragged batch with no nice divisor -> full tiles from the unsliced array + a tiny
    # full-extent tail call (exercises the no-jnp.pad ragged path).
    B3 = 601
    state3 = jax.random.normal(ks3, (B3, STATE_DIM), jnp.float32)
    past_actions3 = jax.random.normal(ka3, (B3, NUM_ACTIONS), jnp.float32)
    out3 = dpg_forward(state3, past_actions3, params)
    jax.block_until_ready(out3)
    _check(out3, reference(state3, past_actions3, w1, b1, w2, b2), "B=601")

    print("KERNEL_OK")
</pallas_src>

<mosaic_0001>
module attributes {stable_mosaic.version = 11 : i64} {
  func.func @dpg_kernel(%arg0: i32, %arg1: memref<2x1022xf32, #tpu.memory_space<vmem>>, %arg2: memref<2x2xf32, #tpu.memory_space<vmem>>, %arg3: memref<1022x512xbf16, #tpu.memory_space<vmem>>, %arg4: memref<2x512xf32, #tpu.memory_space<vmem>>, %arg5: memref<1x512xf32, #tpu.memory_space<vmem>>, %arg6: memref<512x128xbf16, #tpu.memory_space<vmem>>, %arg7: memref<1x128xf32, #tpu.memory_space<vmem>>, %arg8: memref<2x128xf32, #tpu.memory_space<vmem>>) attributes {dimension_semantics = [#tpu.dimension_semantics<parallel>], iteration_bounds = array<i64: 1>, scalar_prefetch = 0 : i64, scratch_operands = 0 : i64, tpu.core_type = #tpu.core_type<tc>, window_params = [{transform_indices = @transform_0, window_bounds = array<i64: 2, 1022>}, {transform_indices = @transform_1, window_bounds = array<i64: 2, 2>}, {pipeline_mode = #tpu.pipeline_mode<synchronous>, transform_indices = @transform_2, window_bounds = array<i64: 1022, 512>}, {pipeline_mode = #tpu.pipeline_mode<synchronous>, transform_indices = @transform_3, window_bounds = array<i64: 2, 512>}, {pipeline_mode = #tpu.pipeline_mode<synchronous>, transform_indices = @transform_4, window_bounds = array<i64: 1, 512>}, {pipeline_mode = #tpu.pipeline_mode<synchronous>, transform_indices = @transform_5, window_bounds = array<i64: 512, 128>}, {pipeline_mode = #tpu.pipeline_mode<synchronous>, transform_indices = @transform_6, window_bounds = array<i64: 1, 128>}, {transform_indices = @transform_7, window_bounds = array<i64: 2, 128>}]} {
    %c0 = arith.constant 0 : index
    %c0_0 = arith.constant 0 : index
    %0 = vector.load %arg1[%c0, %c0_0] : memref<2x1022xf32, #tpu.memory_space<vmem>>, vector<2x1022xf32>
    %1 = arith.truncf %0 : vector<2x1022xf32> to vector<2x1022xbf16>
    %c0_1 = arith.constant 0 : index
    %c0_2 = arith.constant 0 : index
    %2 = vector.load %arg3[%c0_1, %c0_2] : memref<1022x512xbf16, #tpu.memory_space<vmem>>, vector<1022x512xbf16>
    %cst = arith.constant dense<0.000000e+00> : vector<2x512xf32>
    %3 = tpu.matmul %1, %2, %cst {dimension_numbers = #tpu.dot_dimension_numbers<[1], [0], [0], [1], [0, 0, 1, 1], [], []>} : vector<2x1022xbf16>, vector<1022x512xbf16>, vector<2x512xf32> -> vector<2x512xf32>
    %c0_3 = arith.constant 0 : index
    %c0_4 = arith.constant 0 : index
    %4 = vector.load %arg2[%c0_3, %c0_4] : memref<2x2xf32, #tpu.memory_space<vmem>>, vector<2x2xf32>
    %c0_5 = arith.constant 0 : index
    %c0_6 = arith.constant 0 : index
    %5 = vector.load %arg4[%c0_5, %c0_6] : memref<2x512xf32, #tpu.memory_space<vmem>>, vector<2x512xf32>
    %6 = vector.extract_strided_slice %4 {offsets = [0, 0], sizes = [2, 1], strides = [1, 1]} : vector<2x2xf32> to vector<2x1xf32>
    %7 = vector.extract_strided_slice %5 {offsets = [0, 0], sizes = [1, 512], strides = [1, 1]} : vector<2x512xf32> to vector<1x512xf32>
    %8 = vector.broadcast %6 : vector<2x1xf32> to vector<2x512xf32>
    %9 = vector.broadcast %7 : vector<1x512xf32> to vector<2x512xf32>
    %10 = arith.mulf %8, %9 : vector<2x512xf32>
    %11 = arith.addf %3, %10 : vector<2x512xf32>
    %12 = vector.extract_strided_slice %4 {offsets = [0, 1], sizes = [2, 1], strides = [1, 1]} : vector<2x2xf32> to vector<2x1xf32>
    %13 = vector.extract_strided_slice %5 {offsets = [1, 0], sizes = [1, 512], strides = [1, 1]} : vector<2x512xf32> to vector<1x512xf32>
    %14 = vector.broadcast %12 : vector<2x1xf32> to vector<2x512xf32>
    %15 = vector.broadcast %13 : vector<1x512xf32> to vector<2x512xf32>
    %16 = arith.mulf %14, %15 : vector<2x512xf32>
    %17 = arith.addf %11, %16 : vector<2x512xf32>
    %c0_7 = arith.constant 0 : index
    %c0_8 = arith.constant 0 : index
    %18 = vector.load %arg5[%c0_7, %c0_8] : memref<1x512xf32, #tpu.memory_space<vmem>>, vector<1x512xf32>
    %19 = vector.broadcast %18 : vector<1x512xf32> to vector<2x512xf32>
    %20 = arith.addf %17, %19 : vector<2x512xf32>
    %21 = math.tanh %20 : vector<2x512xf32>
    %22 = arith.truncf %21 : vector<2x512xf32> to vector<2x512xbf16>
    %c0_9 = arith.constant 0 : index
    %c0_10 = arith.constant 0 : index
    %23 = vector.load %arg6[%c0_9, %c0_10] : memref<512x128xbf16, #tpu.memory_space<vmem>>, vector<512x128xbf16>
    %cst_11 = arith.constant dense<0.000000e+00> : vector<2x128xf32>
    %24 = tpu.matmul %22, %23, %cst_11 {dimension_numbers = #tpu.dot_dimension_numbers<[1], [0], [0], [1], [0, 0, 1, 1], [], []>} : vector<2x512xbf16>, vector<512x128xbf16>, vector<2x128xf32> -> vector<2x128xf32>
    %c0_12 = arith.constant 0 : index
    %c0_13 = arith.constant 0 : index
    %25 = vector.load %arg7[%c0_12, %c0_13] : memref<1x128xf32, #tpu.memory_space<vmem>>, vector<1x128xf32>
    %26 = vector.broadcast %25 : vector<1x128xf32> to vector<2x128xf32>
    %27 = arith.addf %24, %26 : vector<2x128xf32>
    %c0_14 = arith.constant 0 : index
    %c0_15 = arith.constant 0 : index
    %28 = vector.load %arg8[%c0_14, %c0_15] : memref<2x128xf32, #tpu.memory_space<vmem>>, vector<2x128xf32>
    tpu.vector_store %arg8[%c0_14, %c0_15], %27 {strides = array<i32>} : memref<2x128xf32, #tpu.memory_space<vmem>>, vector<2x128xf32>,
    return
  }
  func.func @transform_0(%arg0: i32) -> (i32, i32) {
    %c0_i32 = arith.constant 0 : i32
    %c0_i32_0 = arith.constant 0 : i32
    return %arg0, %c0_i32 : i32, i32
  }
  func.func @transform_1(%arg0: i32) -> (i32, i32) {
    %c0_i32 = arith.constant 0 : i32
    %c0_i32_0 = arith.constant 0 : i32
    return %arg0, %c0_i32 : i32, i32
  }
  func.func @transform_2(%arg0: i32) -> (i32, i32) {
    %c0_i32 = arith.constant 0 : i32
    %c0_i32_0 = arith.constant 0 : i32
    %c0_i32_1 = arith.constant 0 : i32
    return %c0_i32, %c0_i32_0 : i32, i32
  }
  func.func @transform_3(%arg0: i32) -> (i32, i32) {
    %c0_i32 = arith.constant 0 : i32
    %c0_i32_0 = arith.constant 0 : i32
    %c0_i32_1 = arith.constant 0 : i32
    return %c0_i32, %c0_i32_0 : i32, i32
  }
  func.func @transform_4(%arg0: i32) -> (i32, i32) {
    %c0_i32 = arith.constant 0 : i32
    %c0_i32_0 = arith.constant 0 : i32
    %c0_i32_1 = arith.constant 0 : i32
    return %c0_i32, %c0_i32_0 : i32, i32
  }
  func.func @transform_5(%arg0: i32) -> (i32, i32) {
    %c0_i32 = arith.constant 0 : i32
    %c0_i32_0 = arith.constant 0 : i32
    %c0_i32_1 = arith.constant 0 : i32
    return %c0_i32, %c0_i32_0 : i32, i32
  }
  func.func @transform_6(%arg0: i32) -> (i32, i32) {
    %c0_i32 = arith.constant 0 : i32
    %c0_i32_0 = arith.constant 0 : i32
    %c0_i32_1 = arith.constant 0 : i32
    return %c0_i32, %c0_i32_0 : i32, i32
  }
  func.func @transform_7(%arg0: i32) -> (i32, i32) {
    %c0_i32 = arith.constant 0 : i32
    %c0_i32_0 = arith.constant 0 : i32
    return %arg0, %c0_i32 : i32, i32
  }
}

</mosaic_0001>

<llo_original>
// kernel: tpu_custom_call.1
$region0: #{tpu_custom_call.1}
  #allocation0 [shape = 'u32[]', space=smem, size = 0x4, offset = 0x4, fixed_abs, tag = 'smem constant byte address 0x4 - core index']
  #allocation1 [shape = 'u32[144,128]{1,0:T(1,128)}', space=vmem, size = 0x12000, scoped, tag = 'internal scratch']
  %s0 = inlined_call_operand.hbm [shape: f32[2,1022], index: 0, kind: input, shape index: {}]
  %s1 = inlined_call_operand.vmem [shape: f32[2,2], index: 1, kind: input, shape index: {}]
  %s2 = inlined_call_operand.hbm [shape: bf16[1022,512], index: 2, kind: input, shape index: {}]
  %s3 = inlined_call_operand.vmem [shape: f32[2,512], index: 3, kind: input, shape index: {}]
  %s4 = inlined_call_operand.vmem [shape: f32[1,512], index: 4, kind: input, shape index: {}]
  %s5 = inlined_call_operand.hbm [shape: bf16[512,128], index: 5, kind: input, shape index: {}]
  %s6 = inlined_call_operand.vmem [shape: f32[1,128], index: 6, kind: input, shape index: {}]
  %s7 = inlined_call_operand.hbm [shape: f32[2,128], index: 7, kind: output, shape index: {}]
  %s8 = sld [smem:[#allocation0]]
  $region50: #{tpu_custom_call.1} parent=0
    _
  %s10 = ssub.s32 1, %s8
  %s11 = scalar_select 0, %s10, %s8
  $region1: #{tpu_custom_call.1} parent=0
    #allocation2 [shape = 'u8[8192]{0}', space=vmem, size = 0x2000, scoped, tag = 'input window, operand 0, single buffered']
    #allocation3 [shape = 's32[1]{0}', space=sflag, size = 0x4, scoped, tag = 'scoped memory for tpu_custom_call.1']
    #allocation4 [shape = 's32[1]{0}', space=sflag, size = 0x4, scoped, tag = 'scoped memory for tpu_custom_call.1']
    #allocation5 [shape = 'u8[1048576]{0}', space=vmem, size = 0x100000, scoped, tag = 'input window, operand 2, single buffered']
    #allocation6 [shape = 's32[1]{0}', space=sflag, size = 0x4, scoped, tag = 'scoped memory for tpu_custom_call.1']
    #allocation7 [shape = 'u8[131072]{0}', space=vmem, size = 0x20000, scoped, tag = 'input window, operand 5, single buffered']
    #allocation8 [shape = 'u8[1024]{0}', space=vmem, size = 0x400, scoped, tag = 'output window, operand 0, single buffered']
    %12 = vsyncpa [#allocation3], 0
    %13 = vsyncpa [#allocation6], 0
    %14 = vsyncpa [#allocation4], 0
    // Predicated region
    $region2: #{tpu_custom_call.1} parent=1 // pred_check
      _
    $region3: #{tpu_custom_call.1} parent=1 // pred_check_branch
      %16 = sbr.rel (0) target = $region5
    $region4: #{tpu_custom_call.1} parent=1 // pred_region
      %s18 = ssub.s32 256, 256
      %19 = vsyncadd [#allocation3], %s18
      %s21 = sshll.u32 [#allocation2], 4
      %s22 = int_to_ptr.vmem [resolvable:$true] %s21
      %24 = dma.hbm_to_vmem [thread:$0]  %s0, 256, %s22, [#allocation3]
    $region5: #{tpu_custom_call.1} parent=1 // pred_fallthru
      _
    // Predicated region
    $region6: #{tpu_custom_call.1} parent=1 // pred_check
      _
    $region7: #{tpu_custom_call.1} parent=1 // pred_check_branch
      %26 = sbr.rel (0) target = $region9
    $region8: #{tpu_custom_call.1} parent=1 // pred_region
      _
    $region9: #{tpu_custom_call.1} parent=1 // pred_fallthru
      _
    // Predicated region
    $region10: #{tpu_custom_call.1} parent=1 // pred_check
      _
    $region11: #{tpu_custom_call.1} parent=1 // pred_check_branch
      %28 = sbr.rel (0) target = $region13
    $region12: #{tpu_custom_call.1} parent=1 // pred_region
      %s30 = ssub.s32 32768, 32768
      %31 = vsyncadd [#allocation6], %s30
      %s32 = sshll.u32 [#allocation5], 4
      %s33 = int_to_ptr.vmem [resolvable:$true] %s32
      %38 = dma.hbm_to_vmem [thread:$0]  %s2, 32768, %s33, [#allocation6], 256, 256, 16
    $region13: #{tpu_custom_call.1} parent=1 // pred_fallthru
      _
    // Predicated region
    $region14: #{tpu_custom_call.1} parent=1 // pred_check
      _
    $region15: #{tpu_custom_call.1} parent=1 // pred_check_branch
      %40 = sbr.rel (0) target = $region17
    $region16: #{tpu_custom_call.1} parent=1 // pred_region
      _
    $region17: #{tpu_custom_call.1} parent=1 // pred_fallthru
      _
    // Predicated region
    $region18: #{tpu_custom_call.1} parent=1 // pred_check
      _
    $region19: #{tpu_custom_call.1} parent=1 // pred_check_branch
      %42 = sbr.rel (0) target = $region21
    $region20: #{tpu_custom_call.1} parent=1 // pred_region
      _
    $region21: #{tpu_custom_call.1} parent=1 // pred_fallthru
      _
    // Predicated region
    $region22: #{tpu_custom_call.1} parent=1 // pred_check
      _
    $region23: #{tpu_custom_call.1} parent=1 // pred_check_branch
      %44 = sbr.rel (0) target = $region25
    $region24: #{tpu_custom_call.1} parent=1 // pred_region
      %s46 = ssub.s32 4096, 4096
      %47 = vsyncadd [#allocation6], %s46
      %s48 = sshll.u32 [#allocation7], 4
      %s49 = int_to_ptr.vmem [resolvable:$true] %s48
      %54 = dma.hbm_to_vmem [thread:$0]  %s5, 4096, %s49, [#allocation6], 64, 64, 4
    $region25: #{tpu_custom_call.1} parent=1 // pred_fallthru
      _
    // Predicated region
    $region26: #{tpu_custom_call.1} parent=1 // pred_check
      _
    $region27: #{tpu_custom_call.1} parent=1 // pred_check_branch
      %56 = sbr.rel (0) target = $region29
    $region28: #{tpu_custom_call.1} parent=1 // pred_region
      _
    $region29: #{tpu_custom_call.1} parent=1 // pred_fallthru
      _
    // Predicated region
    $region30: #{tpu_custom_call.1} parent=1 // pred_check
      _
    $region31: #{tpu_custom_call.1} parent=1 // pred_check_branch
      %58 = sbr.rel (0) target = $region33
    $region32: #{tpu_custom_call.1} parent=1 // pred_region
      %59 = dma.done [#allocation3], 256
    $region33: #{tpu_custom_call.1} parent=1 // pred_fallthru
      _
    // Predicated region
    $region34: #{tpu_custom_call.1} parent=1 // pred_check
      _
    $region35: #{tpu_custom_call.1} parent=1 // pred_check_branch
      %61 = sbr.rel (0) target = $region37
    $region36: #{tpu_custom_call.1} parent=1 // pred_region
      %62 = dma.done [#allocation6], 32768
    $region37: #{tpu_custom_call.1} parent=1 // pred_fallthru
      _
    // Predicated region
    $region38: #{tpu_custom_call.1} parent=1 // pred_check
      _
    $region39: #{tpu_custom_call.1} parent=1 // pred_check_branch
      %64 = sbr.rel (0) target = $region41
    $region40: #{tpu_custom_call.1} parent=1 // pred_region
      %65 = dma.done [#allocation6], 4096
    $region41: #{tpu_custom_call.1} parent=1 // pred_fallthru
      _
    %v67 = vld [vmem:[#allocation2] sm:$0xff]
    %v68 = vld [vmem:[#allocation2 + $0x8] sm:$0xff]
    %v71 = vcombine.high %v67, %v67
    %v73 = vunpack.c.l.s4 1983009808
    %v74 = vunpack.c.0.s8 %v73
    %v75 = vlaneseq
    %v76 = vshrl.u32 %v75, 7
    %v77 = vsub.s32 %v74, %v76
    %v78 = vrot.slane %v67, %v77
    %v80 = vunpack.c.l.s4 1983009808
    %v81 = vunpack.c.0.s8 %v80
    %v82 = vlaneseq
    %v83 = vshrl.u32 %v82, 7
    %v84 = vsub.s32 %v81, %v83
    %v85 = vrot.slane %v71, %v84
    %v86 = vcombine.high %v78, %v78
    %v87 = vcombine.high %v85, %v85
    %v88 = vcombine.high %v68, %v68
    %v90 = vunpack.c.l.s4 1983009808
    %v91 = vunpack.c.0.s8 %v90
    %v92 = vlaneseq
    %v93 = vshrl.u32 %v92, 7
    %v94 = vsub.s32 %v91, %v93
    %v95 = vrot.slane %v68, %v94
    %v97 = vunpack.c.l.s4 1983009808
    %v98 = vunpack.c.0.s8 %v97
    %v99 = vlaneseq
    %v100 = vshrl.u32 %v99, 7
    %v101 = vsub.s32 %v98, %v100
    %v102 = vrot.slane %v88, %v101
    %v103 = vcombine.high %v95, %v95
    %v104 = vcombine.high %v102, %v102
    %v113 = vpack.c.bf16 %v78, %v78
    %v114 = vpack.c.bf16 %v86, %v86
    %v115 = vpack.c.bf16 %v85, %v85
    %v116 = vpack.c.bf16 %v87, %v87
    %v117 = vpack.c.bf16 %v95, %v95
    %v118 = vpack.c.bf16 %v103, %v103
    %v119 = vpack.c.bf16 %v102, %v102
    %v120 = vpack.c.bf16 %v104, %v104
    %v121 = vld [vmem:[#allocation5] sm:$0xff]
    %v122 = vld [vmem:[#allocation5 + $0x8] sm:$0xff]
    %v123 = vld [vmem:[#allocation5 + $0x10] sm:$0xff]
    %v124 = vld [vmem:[#allocation5 + $0x18] sm:$0xff]
    %v125 = vld [vmem:[#allocation5 + $0x20] sm:$0xff]
    %v126 = vld [vmem:[#allocation5 + $0x28] sm:$0xff]
    %v127 = vld [vmem:[#allocation5 + $0x30] sm:$0xff]
    %v128 = vld [vmem:[#allocation5 + $0x38] sm:$0xff]
    %v129 = vld [vmem:[#allocation5 + $0x40] sm:$0xff]
    %v130 = vld [vmem:[#allocation5 + $0x48] sm:$0xff]
    %v131 = vld [vmem:[#allocation5 + $0x50] sm:$0xff]
    %v132 = vld [vmem:[#allocation5 + $0x58] sm:$0xff]
    %v133 = vld [vmem:[#allocation5 + $0x60] sm:$0xff]
    %v134 = vld [vmem:[#allocation5 + $0x68] sm:$0xff]
    %v135 = vld [vmem:[#allocation5 + $0x70] sm:$0xff]
    %v136 = vld [vmem:[#allocation5 + $0x78] sm:$0xff]
    %v137 = vld [vmem:[#allocation5 + $0x80] sm:$0xff]
    %v138 = vld [vmem:[#allocation5 + $0x88] sm:$0xff]
    %v139 = vld [vmem:[#allocation5 + $0x90] sm:$0xff]
    %v140 = vld [vmem:[#allocation5 + $0x98] sm:$0xff]
    %v141 = vld [vmem:[#allocation5 + $0xa0] sm:$0xff]
    %v142 = vld [vmem:[#allocation5 + $0xa8] sm:$0xff]
    %v143 = vld [vmem:[#allocation5 + $0xb0] sm:$0xff]
    %v144 = vld [vmem:[#allocation5 + $0xb8] sm:$0xff]
    %v145 = vld [vmem:[#allocation5 + $0xc0] sm:$0xff]
    %v146 = vld [vmem:[#allocation5 + $0xc8] sm:$0xff]
    %v147 = vld [vmem:[#allocation5 + $0xd0] sm:$0xff]
    %v148 = vld [vmem:[#allocation5 + $0xd8] sm:$0xff]
    %v149 = vld [vmem:[#allocation5 + $0xe0] sm:$0xff]
    %v150 = vld [vmem:[#allocation5 + $0xe8] sm:$0xff]
    %v151 = vld [vmem:[#allocation5 + $0xf0] sm:$0xff]
    %v152 = vld [vmem:[#allocation5 + $0xf8] sm:$0xff]
    %v153 = vld [vmem:[#allocation5 + $0x100] sm:$0xff]
    %v154 = vld [vmem:[#allocation5 + $0x108] sm:$0xff]
    %v155 = vld [vmem:[#allocation5 + $0x110] sm:$0xff]
    %v156 = vld [vmem:[#allocation5 + $0x118] sm:$0xff]
    %v157 = vld [vmem:[#allocation5 + $0x120] sm:$0xff]
    %v158 = vld [vmem:[#allocation5 + $0x128] sm:$0xff]
    %v159 = vld [vmem:[#allocation5 + $0x130] sm:$0xff]
    %v160 = vld [vmem:[#allocation5 + $0x138] sm:$0xff]
    %v161 = vld [vmem:[#allocation5 + $0x140] sm:$0xff]
    %v162 = vld [vmem:[#allocation5 + $0x148] sm:$0xff]
    %v163 = vld [vmem:[#allocation5 + $0x150] sm:$0xff]
    %v164 = vld [vmem:[#allocation5 + $0x158] sm:$0xff]
    %v165 = vld [vmem:[#allocation5 + $0x160] sm:$0xff]
    %v166 = vld [vmem:[#allocation5 + $0x168] sm:$0xff]
    %v167 = vld [vmem:[#allocation5 + $0x170] sm:$0xff]
    %v168 = vld [vmem:[#allocation5 + $0x178] sm:$0xff]
    %v169 = vld [vmem:[#allocation5 + $0x180] sm:$0xff]
    %v170 = vld [vmem:[#allocation5 + $0x188] sm:$0xff]
    %v171 = vld [vmem:[#allocation5 + $0x190] sm:$0xff]
    %v172 = vld [vmem:[#allocation5 + $0x198] sm:$0xff]
    %v173 = vld [vmem:[#allocation5 + $0x1a0] sm:$0xff]
    %v174 = vld [vmem:[#allocation5 + $0x1a8] sm:$0xff]
    %v175 = vld [vmem:[#allocation5 + $0x1b0] sm:$0xff]
    %v176 = vld [vmem:[#allocation5 + $0x1b8] sm:$0xff]
    %v177 = vld [vmem:[#allocation5 + $0x1c0] sm:$0xff]
    %v178 = vld [vmem:[#allocation5 + $0x1c8] sm:$0xff]
    %v179 = vld [vmem:[#allocation5 + $0x1d0] sm:$0xff]
    %v180 = vld [vmem:[#allocation5 + $0x1d8] sm:$0xff]
    %v181 = vld [vmem:[#allocation5 + $0x1e0] sm:$0xff]
    %v182 = vld [vmem:[#allocation5 + $0x1e8] sm:$0xff]
    %v183 = vld [vmem:[#allocation5 + $0x1f0] sm:$0xff]
    %v184 = vld [vmem:[#allocation5 + $0x1f8] sm:$0xff]
    %v185 = vld [vmem:[#allocation5 + $0x200] sm:$0xff]
    %v186 = vld [vmem:[#allocation5 + $0x208] sm:$0xff]
    %v187 = vld [vmem:[#allocation5 + $0x210] sm:$0xff]
    %v188 = vld [vmem:[#allocation5 + $0x218] sm:$0xff]
    %v189 = vld [vmem:[#allocation5 + $0x220] sm:$0xff]
    %v190 = vld [vmem:[#allocation5 + $0x228] sm:$0xff]
    %v191 = vld [vmem:[#allocation5 + $0x230] sm:$0xff]
    %v192 = vld [vmem:[#allocation5 + $0x238] sm:$0xff]
    %v193 = vld [vmem:[#allocation5 + $0x240] sm:$0xff]
    %v194 = vld [vmem:[#allocation5 + $0x248] sm:$0xff]
    %v195 = vld [vmem:[#allocation5 + $0x250] sm:$0xff]
    %v196 = vld [vmem:[#allocation5 + $0x258] sm:$0xff]
    %v197 = vld [vmem:[#allocation5 + $0x260] sm:$0xff]
    %v198 = vld [vmem:[#allocation5 + $0x268] sm:$0xff]
    %v199 = vld [vmem:[#allocation5 + $0x270] sm:$0xff]
    %v200 = vld [vmem:[#allocation5 + $0x278] sm:$0xff]
    %v201 = vld [vmem:[#allocation5 + $0x280] sm:$0xff]
    %v202 = vld [vmem:[#allocation5 + $0x288] sm:$0xff]
    %v203 = vld [vmem:[#allocation5 + $0x290] sm:$0xff]
    %v204 = vld [vmem:[#allocation5 + $0x298] sm:$0xff]
    %v205 = vld [vmem:[#allocation5 + $0x2a0] sm:$0xff]
    %v206 = vld [vmem:[#allocation5 + $0x2a8] sm:$0xff]
    %v207 = vld [vmem:[#allocation5 + $0x2b0] sm:$0xff]
    %v208 = vld [vmem:[#allocation5 + $0x2b8] sm:$0xff]
    %v209 = vld [vmem:[#allocation5 + $0x2c0] sm:$0xff]
    %v210 = vld [vmem:[#allocation5 + $0x2c8] sm:$0xff]
    %v211 = vld [vmem:[#allocation5 + $0x2d0] sm:$0xff]
    %v212 = vld [vmem:[#allocation5 + $0x2d8] sm:$0xff]
    %v213 = vld [vmem:[#allocation5 + $0x2e0] sm:$0xff]
    %v214 = vld [vmem:[#allocation5 + $0x2e8] sm:$0xff]
    %v215 = vld [vmem:[#allocation5 + $0x2f0] sm:$0xff]
    %v216 = vld [vmem:[#allocation5 + $0x2f8] sm:$0xff]
    %v217 = vld [vmem:[#allocation5 + $0x300] sm:$0xff]
    %v218 = vld [vmem:[#allocation5 + $0x308] sm:$0xff]
    %v219 = vld [vmem:[#allocation5 + $0x310] sm:$0xff]
    %v220 = vld [vmem:[#allocation5 + $0x318] sm:$0xff]
    %v221 = vld [vmem:[#allocation5 + $0x320] sm:$0xff]
    %v222 = vld [vmem:[#allocation5 + $0x328] sm:$0xff]
    %v223 = vld [vmem:[#allocation5 + $0x330] sm:$0xff]
    %v224 = vld [vmem:[#allocation5 + $0x338] sm:$0xff]
    %v225 = vld [vmem:[#allocation5 + $0x340] sm:$0xff]
    %v226 = vld [vmem:[#allocation5 + $0x348] sm:$0xff]
    %v227 = vld [vmem:[#allocation5 + $0x350] sm:$0xff]
    %v228 = vld [vmem:[#allocation5 + $0x358] sm:$0xff]
    %v229 = vld [vmem:[#allocation5 + $0x360] sm:$0xff]
    %v230 = vld [vmem:[#allocation5 + $0x368] sm:$0xff]
    %v231 = vld [vmem:[#allocation5 + $0x370] sm:$0xff]
    %v232 = vld [vmem:[#allocation5 + $0x378] sm:$0xff]
    %v233 = vld [vmem:[#allocation5 + $0x380] sm:$0xff]
    %v234 = vld [vmem:[#allocation5 + $0x388] sm:$0xff]
    %v235 = vld [vmem:[#allocation5 + $0x390] sm:$0xff]
    %v236 = vld [vmem:[#allocation5 + $0x398] sm:$0xff]
    %v237 = vld [vmem:[#allocation5 + $0x3a0] sm:$0xff]
    %v238 = vld [vmem:[#allocation5 + $0x3a8] sm:$0xff]
    %v239 = vld [vmem:[#allocation5 + $0x3b0] sm:$0xff]
    %v240 = vld [vmem:[#allocation5 + $0x3b8] sm:$0xff]
    %v241 = vld [vmem:[#allocation5 + $0x3c0] sm:$0xff]
    %v242 = vld [vmem:[#allocation5 + $0x3c8] sm:$0xff]
    %v243 = vld [vmem:[#allocation5 + $0x3d0] sm:$0xff]
    %v244 = vld [vmem:[#allocation5 + $0x3d8] sm:$0xff]
    %v245 = vld [vmem:[#allocation5 + $0x3e0] sm:$0xff]
    %v246 = vld [vmem:[#allocation5 + $0x3e8] sm:$0xff]
    %v247 = vld [vmem:[#allocation5 + $0x3f0] sm:$0xff]
    %v248 = vld [vmem:[#allocation5 + $0x3f8] sm:$0xff]
    %v249 = vld [vmem:[#allocation5 + $0x400] sm:$0xff]
    %v250 = vld [vmem:[#allocation5 + $0x408] sm:$0xff]
    %v251 = vld [vmem:[#allocation5 + $0x410] sm:$0xff]
    %v252 = vld [vmem:[#allocation5 + $0x418] sm:$0xff]
    %v253 = vld [vmem:[#allocation5 + $0x420] sm:$0xff]
    %v254 = vld [vmem:[#allocation5 + $0x428] sm:$0xff]
    %v255 = vld [vmem:[#allocation5 + $0x430] sm:$0xff]
    %v256 = vld [vmem:[#allocation5 + $0x438] sm:$0xff]
    %v257 = vld [vmem:[#allocation5 + $0x440] sm:$0xff]
    %v258 = vld [vmem:[#allocation5 + $0x448] sm:$0xff]
    %v259 = vld [vmem:[#allocation5 + $0x450] sm:$0xff]
    %v260 = vld [vmem:[#allocation5 + $0x458] sm:$0xff]
    %v261 = vld [vmem:[#allocation5 + $0x460] sm:$0xff]
    %v262 = vld [vmem:[#allocation5 + $0x468] sm:$0xff]
    %v263 = vld [vmem:[#allocation5 + $0x470] sm:$0xff]
    %v264 = vld [vmem:[#allocation5 + $0x478] sm:$0xff]
    %v265 = vld [vmem:[#allocation5 + $0x480] sm:$0xff]
    %v266 = vld [vmem:[#allocation5 + $0x488] sm:$0xff]
    %v267 = vld [vmem:[#allocation5 + $0x490] sm:$0xff]
    %v268 = vld [vmem:[#allocation5 + $0x498] sm:$0xff]
    %v269 = vld [vmem:[#allocation5 + $0x4a0] sm:$0xff]
    %v270 = vld [vmem:[#allocation5 + $0x4a8] sm:$0xff]
    %v271 = vld [vmem:[#allocation5 + $0x4b0] sm:$0xff]
    %v272 = vld [vmem:[#allocation5 + $0x4b8] sm:$0xff]
    %v273 = vld [vmem:[#allocation5 + $0x4c0] sm:$0xff]
    %v274 = vld [vmem:[#allocation5 + $0x4c8] sm:$0xff]
    %v275 = vld [vmem:[#allocation5 + $0x4d0] sm:$0xff]
    %v276 = vld [vmem:[#allocation5 + $0x4d8] sm:$0xff]
    %v277 = vld [vmem:[#allocation5 + $0x4e0] sm:$0xff]
    %v278 = vld [vmem:[#allocation5 + $0x4e8] sm:$0xff]
    %v279 = vld [vmem:[#allocation5 + $0x4f0] sm:$0xff]
    %v280 = vld [vmem:[#allocation5 + $0x4f8] sm:$0xff]
    %v281 = vld [vmem:[#allocation5 + $0x500] sm:$0xff]
    %v282 = vld [vmem:[#allocation5 + $0x508] sm:$0xff]
    %v283 = vld [vmem:[#allocation5 + $0x510] sm:$0xff]
    %v284 = vld [vmem:[#allocation5 + $0x518] sm:$0xff]
    %v285 = vld [vmem:[#allocation5 + $0x520] sm:$0xff]
    %v286 = vld [vmem:[#allocation5 + $0x528] sm:$0xff]
    %v287 = vld [vmem:[#allocation5 + $0x530] sm:$0xff]
    %v288 = vld [vmem:[#allocation5 + $0x538] sm:$0xff]
    %v289 = vld [vmem:[#allocation5 + $0x540] sm:$0xff]
    %v290 = vld [vmem:[#allocation5 + $0x548] sm:$0xff]
    %v291 = vld [vmem:[#allocation5 + $0x550] sm:$0xff]
    %v292 = vld [vmem:[#allocation5 + $0x558] sm:$0xff]
    %v293 = vld [vmem:[#allocation5 + $0x560] sm:$0xff]
    %v294 = vld [vmem:[#allocation5 + $0x568] sm:$0xff]
    %v295 = vld [vmem:[#allocation5 + $0x570] sm:$0xff]
    %v296 = vld [vmem:[#allocation5 + $0x578] sm:$0xff]
    %v297 = vld [vmem:[#allocation5 + $0x580] sm:$0xff]
    %v298 = vld [vmem:[#allocation5 + $0x588] sm:$0xff]
    %v299 = vld [vmem:[#allocation5 + $0x590] sm:$0xff]
    %v300 = vld [vmem:[#allocation5 + $0x598] sm:$0xff]
    %v301 = vld [vmem:[#allocation5 + $0x5a0] sm:$0xff]
    %v302 = vld [vmem:[#allocation5 + $0x5a8] sm:$0xff]
    %v303 = vld [vmem:[#allocation5 + $0x5b0] sm:$0xff]
    %v304 = vld [vmem:[#allocation5 + $0x5b8] sm:$0xff]
    %v305 = vld [vmem:[#allocation5 + $0x5c0] sm:$0xff]
    %v306 = vld [vmem:[#allocation5 + $0x5c8] sm:$0xff]
    %v307 = vld [vmem:[#allocation5 + $0x5d0] sm:$0xff]
    %v308 = vld [vmem:[#allocation5 + $0x5d8] sm:$0xff]
    %v309 = vld [vmem:[#allocation5 + $0x5e0] sm:$0xff]
    %v310 = vld [vmem:[#allocation5 + $0x5e8] sm:$0xff]
    %v311 = vld [vmem:[#allocation5 + $0x5f0] sm:$0xff]
    %v312 = vld [vmem:[#allocation5 + $0x5f8] sm:$0xff]
    %v313 = vld [vmem:[#allocation5 + $0x600] sm:$0xff]
    %v314 = vld [vmem:[#allocation5 + $0x608] sm:$0xff]
    %v315 = vld [vmem:[#allocation5 + $0x610] sm:$0xff]
    %v316 = vld [vmem:[#allocation5 + $0x618] sm:$0xff]
    %v317 = vld [vmem:[#allocation5 + $0x620] sm:$0xff]
    %v318 = vld [vmem:[#allocation5 + $0x628] sm:$0xff]
    %v319 = vld [vmem:[#allocation5 + $0x630] sm:$0xff]
    %v320 = vld [vmem:[#allocation5 + $0x638] sm:$0xff]
    %v321 = vld [vmem:[#allocation5 + $0x640] sm:$0xff]
    %v322 = vld [vmem:[#allocation5 + $0x648] sm:$0xff]
    %v323 = vld [vmem:[#allocation5 + $0x650] sm:$0xff]
    %v324 = vld [vmem:[#allocation5 + $0x658] sm:$0xff]
    %v325 = vld [vmem:[#allocation5 + $0x660] sm:$0xff]
    %v326 = vld [vmem:[#allocation5 + $0x668] sm:$0xff]
    %v327 = vld [vmem:[#allocation5 + $0x670] sm:$0xff]
    %v328 = vld [vmem:[#allocation5 + $0x678] sm:$0xff]
    %v329 = vld [vmem:[#allocation5 + $0x680] sm:$0xff]
    %v330 = vld [vmem:[#allocation5 + $0x688] sm:$0xff]
    %v331 = vld [vmem:[#allocation5 + $0x690] sm:$0xff]
    %v332 = vld [vmem:[#allocation5 + $0x698] sm:$0xff]
    %v333 = vld [vmem:[#allocation5 + $0x6a0] sm:$0xff]
    %v334 = vld [vmem:[#allocation5 + $0x6a8] sm:$0xff]
    %v335 = vld [vmem:[#allocation5 + $0x6b0] sm:$0xff]
    %v336 = vld [vmem:[#allocation5 + $0x6b8] sm:$0xff]
    %v337 = vld [vmem:[#allocation5 + $0x6c0] sm:$0xff]
    %v338 = vld [vmem:[#allocation5 + $0x6c8] sm:$0xff]
    %v339 = vld [vmem:[#allocation5 + $0x6d0] sm:$0xff]
    %v340 = vld [vmem:[#allocation5 + $0x6d8] sm:$0xff]
    %v341 = vld [vmem:[#allocation5 + $0x6e0] sm:$0xff]
    %v342 = vld [vmem:[#allocation5 + $0x6e8] sm:$0xff]
    %v343 = vld [vmem:[#allocation5 + $0x6f0] sm:$0xff]
    %v344 = vld [vmem:[#allocation5 + $0x6f8] sm:$0xff]
    %v345 = vld [vmem:[#allocation5 + $0x700] sm:$0xff]
    %v346 = vld [vmem:[#allocation5 + $0x708] sm:$0xff]
    %v347 = vld [vmem:[#allocation5 + $0x710] sm:$0xff]
    %v348 = vld [vmem:[#allocation5 + $0x718] sm:$0xff]
    %v349 = vld [vmem:[#allocation5 + $0x720] sm:$0xff]
    %v350 = vld [vmem:[#allocation5 + $0x728] sm:$0xff]
    %v351 = vld [vmem:[#allocation5 + $0x730] sm:$0xff]
    %v352 = vld [vmem:[#allocation5 + $0x738] sm:$0xff]
    %v353 = vld [vmem:[#allocation5 + $0x740] sm:$0xff]
    %v354 = vld [vmem:[#allocation5 + $0x748] sm:$0xff]
    %v355 = vld [vmem:[#allocation5 + $0x750] sm:$0xff]
    %v356 = vld [vmem:[#allocation5 + $0x758] sm:$0xff]
    %v357 = vld [vmem:[#allocation5 + $0x760] sm:$0xff]
    %v358 = vld [vmem:[#allocation5 + $0x768] sm:$0xff]
    %v359 = vld [vmem:[#allocation5 + $0x770] sm:$0xff]
    %v360 = vld [vmem:[#allocation5 + $0x778] sm:$0xff]
    %v361 = vld [vmem:[#allocation5 + $0x780] sm:$0xff]
    %v362 = vld [vmem:[#allocation5 + $0x788] sm:$0xff]
    %v363 = vld [vmem:[#allocation5 + $0x790] sm:$0xff]
    %v364 = vld [vmem:[#allocation5 + $0x798] sm:$0xff]
    %v365 = vld [vmem:[#allocation5 + $0x7a0] sm:$0xff]
    %v366 = vld [vmem:[#allocation5 + $0x7a8] sm:$0xff]
    %v367 = vld [vmem:[#allocation5 + $0x7b0] sm:$0xff]
    %v368 = vld [vmem:[#allocation5 + $0x7b8] sm:$0xff]
    %v369 = vld [vmem:[#allocation5 + $0x7c0] sm:$0xff]
    %v370 = vld [vmem:[#allocation5 + $0x7c8] sm:$0xff]
    %v371 = vld [vmem:[#allocation5 + $0x7d0] sm:$0xff]
    %v372 = vld [vmem:[#allocation5 + $0x7d8] sm:$0xff]
    %v373 = vld [vmem:[#allocation5 + $0x7e0] sm:$0xff]
    %v374 = vld [vmem:[#allocation5 + $0x7e8] sm:$0xff]
    %v375 = vld [vmem:[#allocation5 + $0x7f0] sm:$0x77]
    %v376 = vld [vmem:[#allocation5 + $0x7f8] sm:$0x77]
    %v377 = vld [vmem:[%s1] sm:$0x3]
    %v378 = vld [vmem:[%s3] sm:$0xff]
    %380 = vset.pattern.permute.xlu0 0
    %381 = vperm.xlu0 %380, %v377
    %v382 = vpop.permute.xlu0 %381
    %v385 = vlaneseq
    %v386 = vshrl.u32 %v385, 7
    %v387 = vsub.s32 0, %v386
    %v388 = vrot.slane %v378, %v387
    %v389 = vlaneseq
    %v390 = vshrl.u32 %v389, 7
    %v391 = vsub.s32 2, %v390
    %v392 = vrot.slane %v378, %v391
    %v393 = vlaneseq
    %v394 = vshrl.u32 %v393, 7
    %v395 = vsub.s32 4, %v394
    %v396 = vrot.slane %v378, %v395
    %v397 = vlaneseq
    %v398 = vshrl.u32 %v397, 7
    %v399 = vsub.s32 6, %v398
    %v400 = vrot.slane %v378, %v399
    %v405 = vlaneseq
    %v406 = vshrl.u32 %v405, 7
    %v407 = vsub.s32 0, %v406
    %v408 = vrot.slane %v388, %v407
    %v409 = vlaneseq
    %v410 = vshrl.u32 %v409, 7
    %v411 = vsub.s32 0, %v410
    %v412 = vrot.slane %v392, %v411
    %v413 = vlaneseq
    %v414 = vshrl.u32 %v413, 7
    %v415 = vsub.s32 0, %v414
    %v416 = vrot.slane %v396, %v415
    %v417 = vlaneseq
    %v418 = vshrl.u32 %v417, 7
    %v419 = vsub.s32 0, %v418
    %v420 = vrot.slane %v400, %v419
    %v421 = vmul.f32 %v382, %v408
    %v422 = vmul.f32 %v382, %v412
    %v423 = vmul.f32 %v382, %v416
    %v424 = vmul.f32 %v382, %v420
    %v681 = vunpack.c.l.b16 %v121
    %v682 = vunpack.c.h.b16 %v121
    %v683 = vunpack.c.l.b16 %v122
    %v684 = vunpack.c.h.b16 %v122
    %v685 = vunpack.c.l.b16 %v123
    %v686 = vunpack.c.h.b16 %v123
    %v687 = vunpack.c.l.b16 %v124
    %v688 = vunpack.c.h.b16 %v124
    %v689 = vunpack.c.l.b16 %v125
    %v690 = vunpack.c.h.b16 %v125
    %v691 = vunpack.c.l.b16 %v126
    %v692 = vunpack.c.h.b16 %v126
    %v693 = vunpack.c.l.b16 %v127
    %v694 = vunpack.c.h.b16 %v127
    %v695 = vunpack.c.l.b16 %v128
    %v696 = vunpack.c.h.b16 %v128
    %v697 = vunpack.c.l.b16 %v129
    %v698 = vunpack.c.h.b16 %v129
    %v699 = vunpack.c.l.b16 %v130
    %v700 = vunpack.c.h.b16 %v130
    %v701 = vunpack.c.l.b16 %v131
    %v702 = vunpack.c.h.b16 %v131
    %v703 = vunpack.c.l.b16 %v132
    %v704 = vunpack.c.h.b16 %v132
    %v705 = vunpack.c.l.b16 %v133
    %v706 = vunpack.c.h.b16 %v133
    %v707 = vunpack.c.l.b16 %v134
    %v708 = vunpack.c.h.b16 %v134
    %v709 = vunpack.c.l.b16 %v135
    %v710 = vunpack.c.h.b16 %v135
    %v711 = vunpack.c.l.b16 %v136
    %v712 = vunpack.c.h.b16 %v136
    %v713 = vunpack.c.l.b16 %v137
    %v714 = vunpack.c.h.b16 %v137
    %v715 = vunpack.c.l.b16 %v138
    %v716 = vunpack.c.h.b16 %v138
    %v717 = vunpack.c.l.b16 %v139
    %v718 = vunpack.c.h.b16 %v139
    %v719 = vunpack.c.l.b16 %v140
    %v720 = vunpack.c.h.b16 %v140
    %v721 = vunpack.c.l.b16 %v141
    %v722 = vunpack.c.h.b16 %v141
    %v723 = vunpack.c.l.b16 %v142
    %v724 = vunpack.c.h.b16 %v142
    %v725 = vunpack.c.l.b16 %v143
    %v726 = vunpack.c.h.b16 %v143
    %v727 = vunpack.c.l.b16 %v144
    %v728 = vunpack.c.h.b16 %v144
    %v729 = vunpack.c.l.b16 %v145
    %v730 = vunpack.c.h.b16 %v145
    %v731 = vunpack.c.l.b16 %v146
    %v732 = vunpack.c.h.b16 %v146
    %v733 = vunpack.c.l.b16 %v147
    %v734 = vunpack.c.h.b16 %v147
    %v735 = vunpack.c.l.b16 %v148
    %v736 = vunpack.c.h.b16 %v148
    %v737 = vunpack.c.l.b16 %v149
    %v738 = vunpack.c.h.b16 %v149
    %v739 = vunpack.c.l.b16 %v150
    %v740 = vunpack.c.h.b16 %v150
    %v741 = vunpack.c.l.b16 %v151
    %v742 = vunpack.c.h.b16 %v151
    %v743 = vunpack.c.l.b16 %v152
    %v744 = vunpack.c.h.b16 %v152
    %v745 = vunpack.c.l.b16 %v153
    %v746 = vunpack.c.h.b16 %v153
    %v747 = vunpack.c.l.b16 %v154
    %v748 = vunpack.c.h.b16 %v154
    %v749 = vunpack.c.l.b16 %v155
    %v750 = vunpack.c.h.b16 %v155
    %v751 = vunpack.c.l.b16 %v156
    %v752 = vunpack.c.h.b16 %v156
    %v753 = vunpack.c.l.b16 %v157
    %v754 = vunpack.c.h.b16 %v157
    %v755 = vunpack.c.l.b16 %v158
    %v756 = vunpack.c.h.b16 %v158
    %v757 = vunpack.c.l.b16 %v159
    %v758 = vunpack.c.h.b16 %v159
    %v759 = vunpack.c.l.b16 %v160
    %v760 = vunpack.c.h.b16 %v160
    %v761 = vunpack.c.l.b16 %v161
    %v762 = vunpack.c.h.b16 %v161
    %v763 = vunpack.c.l.b16 %v162
    %v764 = vunpack.c.h.b16 %v162
    %v765 = vunpack.c.l.b16 %v163
    %v766 = vunpack.c.h.b16 %v163
    %v767 = vunpack.c.l.b16 %v164
    %v768 = vunpack.c.h.b16 %v164
    %v769 = vunpack.c.l.b16 %v165
    %v770 = vunpack.c.h.b16 %v165
    %v771 = vunpack.c.l.b16 %v166
    %v772 = vunpack.c.h.b16 %v166
    %v773 = vunpack.c.l.b16 %v167
    %v774 = vunpack.c.h.b16 %v167
    %v775 = vunpack.c.l.b16 %v168
    %v776 = vunpack.c.h.b16 %v168
    %v777 = vunpack.c.l.b16 %v169
    %v778 = vunpack.c.h.b16 %v169
    %v779 = vunpack.c.l.b16 %v170
    %v780 = vunpack.c.h.b16 %v170
    %v781 = vunpack.c.l.b16 %v171
    %v782 = vunpack.c.h.b16 %v171
    %v783 = vunpack.c.l.b16 %v172
    %v784 = vunpack.c.h.b16 %v172
    %v785 = vunpack.c.l.b16 %v173
    %v786 = vunpack.c.h.b16 %v173
    %v787 = vunpack.c.l.b16 %v174
    %v788 = vunpack.c.h.b16 %v174
    %v789 = vunpack.c.l.b16 %v175
    %v790 = vunpack.c.h.b16 %v175
    %v791 = vunpack.c.l.b16 %v176
    %v792 = vunpack.c.h.b16 %v176
    %v793 = vunpack.c.l.b16 %v177
    %v794 = vunpack.c.h.b16 %v177
    %v795 = vunpack.c.l.b16 %v178
    %v796 = vunpack.c.h.b16 %v178
    %v797 = vunpack.c.l.b16 %v179
    %v798 = vunpack.c.h.b16 %v179
    %v799 = vunpack.c.l.b16 %v180
    %v800 = vunpack.c.h.b16 %v180
    %v801 = vunpack.c.l.b16 %v181
    %v802 = vunpack.c.h.b16 %v181
    %v803 = vunpack.c.l.b16 %v182
    %v804 = vunpack.c.h.b16 %v182
    %v805 = vunpack.c.l.b16 %v183
    %v806 = vunpack.c.h.b16 %v183
    %v807 = vunpack.c.l.b16 %v184
    %v808 = vunpack.c.h.b16 %v184
    %v809 = vunpack.c.l.b16 %v185
    %v810 = vunpack.c.h.b16 %v185
    %v811 = vunpack.c.l.b16 %v186
    %v812 = vunpack.c.h.b16 %v186
    %v813 = vunpack.c.l.b16 %v187
    %v814 = vunpack.c.h.b16 %v187
    %v815 = vunpack.c.l.b16 %v188
    %v816 = vunpack.c.h.b16 %v188
    %v817 = vunpack.c.l.b16 %v189
    %v818 = vunpack.c.h.b16 %v189
    %v819 = vunpack.c.l.b16 %v190
    %v820 = vunpack.c.h.b16 %v190
    %v821 = vunpack.c.l.b16 %v191
    %v822 = vunpack.c.h.b16 %v191
    %v823 = vunpack.c.l.b16 %v192
    %v824 = vunpack.c.h.b16 %v192
    %v825 = vunpack.c.l.b16 %v193
    %v826 = vunpack.c.h.b16 %v193
    %v827 = vunpack.c.l.b16 %v194
    %v828 = vunpack.c.h.b16 %v194
    %v829 = vunpack.c.l.b16 %v195
    %v830 = vunpack.c.h.b16 %v195
    %v831 = vunpack.c.l.b16 %v196
    %v832 = vunpack.c.h.b16 %v196
    %v833 = vunpack.c.l.b16 %v197
    %v834 = vunpack.c.h.b16 %v197
    %v835 = vunpack.c.l.b16 %v198
    %v836 = vunpack.c.h.b16 %v198
    %v837 = vunpack.c.l.b16 %v199
    %v838 = vunpack.c.h.b16 %v199
    %v839 = vunpack.c.l.b16 %v200
    %v840 = vunpack.c.h.b16 %v200
    %v841 = vunpack.c.l.b16 %v201
    %v842 = vunpack.c.h.b16 %v201
    %v843 = vunpack.c.l.b16 %v202
    %v844 = vunpack.c.h.b16 %v202
    %v845 = vunpack.c.l.b16 %v203
    %v846 = vunpack.c.h.b16 %v203
    %v847 = vunpack.c.l.b16 %v204
    %v848 = vunpack.c.h.b16 %v204
    %v849 = vunpack.c.l.b16 %v205
    %v850 = vunpack.c.h.b16 %v205
    %v851 = vunpack.c.l.b16 %v206
    %v852 = vunpack.c.h.b16 %v206
    %v853 = vunpack.c.l.b16 %v207
    %v854 = vunpack.c.h.b16 %v207
    %v855 = vunpack.c.l.b16 %v208
    %v856 = vunpack.c.h.b16 %v208
    %v857 = vunpack.c.l.b16 %v209
    %v858 = vunpack.c.h.b16 %v209
    %v859 = vunpack.c.l.b16 %v210
    %v860 = vunpack.c.h.b16 %v210
    %v861 = vunpack.c.l.b16 %v211
    %v862 = vunpack.c.h.b16 %v211
    %v863 = vunpack.c.l.b16 %v212
    %v864 = vunpack.c.h.b16 %v212
    %v865 = vunpack.c.l.b16 %v213
    %v866 = vunpack.c.h.b16 %v213
    %v867 = vunpack.c.l.b16 %v214
    %v868 = vunpack.c.h.b16 %v214
    %v869 = vunpack.c.l.b16 %v215
    %v870 = vunpack.c.h.b16 %v215
    %v871 = vunpack.c.l.b16 %v216
    %v872 = vunpack.c.h.b16 %v216
    %v873 = vunpack.c.l.b16 %v217
    %v874 = vunpack.c.h.b16 %v217
    %v875 = vunpack.c.l.b16 %v218
    %v876 = vunpack.c.h.b16 %v218
    %v877 = vunpack.c.l.b16 %v219
    %v878 = vunpack.c.h.b16 %v219
    %v879 = vunpack.c.l.b16 %v220
    %v880 = vunpack.c.h.b16 %v220
    %v881 = vunpack.c.l.b16 %v221
    %v882 = vunpack.c.h.b16 %v221
    %v883 = vunpack.c.l.b16 %v222
    %v884 = vunpack.c.h.b16 %v222
    %v885 = vunpack.c.l.b16 %v223
    %v886 = vunpack.c.h.b16 %v223
    %v887 = vunpack.c.l.b16 %v224
    %v888 = vunpack.c.h.b16 %v224
    %v889 = vunpack.c.l.b16 %v225
    %v890 = vunpack.c.h.b16 %v225
    %v891 = vunpack.c.l.b16 %v226
    %v892 = vunpack.c.h.b16 %v226
    %v893 = vunpack.c.l.b16 %v227
    %v894 = vunpack.c.h.b16 %v227
    %v895 = vunpack.c.l.b16 %v228
    %v896 = vunpack.c.h.b16 %v228
    %v897 = vunpack.c.l.b16 %v229
    %v898 = vunpack.c.h.b16 %v229
    %v899 = vunpack.c.l.b16 %v230
    %v900 = vunpack.c.h.b16 %v230
    %v901 = vunpack.c.l.b16 %v231
    %v902 = vunpack.c.h.b16 %v231
    %v903 = vunpack.c.l.b16 %v232
    %v904 = vunpack.c.h.b16 %v232
    %v905 = vunpack.c.l.b16 %v233
    %v906 = vunpack.c.h.b16 %v233
    %v907 = vunpack.c.l.b16 %v234
    %v908 = vunpack.c.h.b16 %v234
    %v909 = vunpack.c.l.b16 %v235
    %v910 = vunpack.c.h.b16 %v235
    %v911 = vunpack.c.l.b16 %v236
    %v912 = vunpack.c.h.b16 %v236
    %v913 = vunpack.c.l.b16 %v237
    %v914 = vunpack.c.h.b16 %v237
    %v915 = vunpack.c.l.b16 %v238
    %v916 = vunpack.c.h.b16 %v238
    %v917 = vunpack.c.l.b16 %v239
    %v918 = vunpack.c.h.b16 %v239
    %v919 = vunpack.c.l.b16 %v240
    %v920 = vunpack.c.h.b16 %v240
    %v921 = vunpack.c.l.b16 %v241
    %v922 = vunpack.c.h.b16 %v241
    %v923 = vunpack.c.l.b16 %v242
    %v924 = vunpack.c.h.b16 %v242
    %v925 = vunpack.c.l.b16 %v243
    %v926 = vunpack.c.h.b16 %v243
    %v927 = vunpack.c.l.b16 %v244
    %v928 = vunpack.c.h.b16 %v244
    %v929 = vunpack.c.l.b16 %v245
    %v930 = vunpack.c.h.b16 %v245
    %v931 = vunpack.c.l.b16 %v246
    %v932 = vunpack.c.h.b16 %v246
    %v933 = vunpack.c.l.b16 %v247
    %v934 = vunpack.c.h.b16 %v247
    %v935 = vunpack.c.l.b16 %v248
    %v936 = vunpack.c.h.b16 %v248
    %v937 = vunpack.c.l.b16 %v249
    %v938 = vunpack.c.h.b16 %v249
    %v939 = vunpack.c.l.b16 %v250
    %v940 = vunpack.c.h.b16 %v250
    %v941 = vunpack.c.l.b16 %v251
    %v942 = vunpack.c.h.b16 %v251
    %v943 = vunpack.c.l.b16 %v252
    %v944 = vunpack.c.h.b16 %v252
    %v945 = vunpack.c.l.b16 %v253
    %v946 = vunpack.c.h.b16 %v253
    %v947 = vunpack.c.l.b16 %v254
    %v948 = vunpack.c.h.b16 %v254
    %v949 = vunpack.c.l.b16 %v255
    %v950 = vunpack.c.h.b16 %v255
    %v951 = vunpack.c.l.b16 %v256
    %v952 = vunpack.c.h.b16 %v256
    %v953 = vunpack.c.l.b16 %v257
    %v954 = vunpack.c.h.b16 %v257
    %v955 = vunpack.c.l.b16 %v258
    %v956 = vunpack.c.h.b16 %v258
    %v957 = vunpack.c.l.b16 %v259
    %v958 = vunpack.c.h.b16 %v259
    %v959 = vunpack.c.l.b16 %v260
    %v960 = vunpack.c.h.b16 %v260
    %v961 = vunpack.c.l.b16 %v261
    %v962 = vunpack.c.h.b16 %v261
    %v963 = vunpack.c.l.b16 %v262
    %v964 = vunpack.c.h.b16 %v262
    %v965 = vunpack.c.l.b16 %v263
    %v966 = vunpack.c.h.b16 %v263
    %v967 = vunpack.c.l.b16 %v264
    %v968 = vunpack.c.h.b16 %v264
    %v969 = vunpack.c.l.b16 %v265
    %v970 = vunpack.c.h.b16 %v265
    %v971 = vunpack.c.l.b16 %v266
    %v972 = vunpack.c.h.b16 %v266
    %v973 = vunpack.c.l.b16 %v267
    %v974 = vunpack.c.h.b16 %v267
    %v975 = vunpack.c.l.b16 %v268
    %v976 = vunpack.c.h.b16 %v268
    %v977 = vunpack.c.l.b16 %v269
    %v978 = vunpack.c.h.b16 %v269
    %v979 = vunpack.c.l.b16 %v270
    %v980 = vunpack.c.h.b16 %v270
    %v981 = vunpack.c.l.b16 %v271
    %v982 = vunpack.c.h.b16 %v271
    %v983 = vunpack.c.l.b16 %v272
    %v984 = vunpack.c.h.b16 %v272
    %v985 = vunpack.c.l.b16 %v273
    %v986 = vunpack.c.h.b16 %v273
    %v987 = vunpack.c.l.b16 %v274
    %v988 = vunpack.c.h.b16 %v274
    %v989 = vunpack.c.l.b16 %v275
    %v990 = vunpack.c.h.b16 %v275
    %v991 = vunpack.c.l.b16 %v276
    %v992 = vunpack.c.h.b16 %v276
    %v993 = vunpack.c.l.b16 %v277
    %v994 = vunpack.c.h.b16 %v277
    %v995 = vunpack.c.l.b16 %v278
    %v996 = vunpack.c.h.b16 %v278
    %v997 = vunpack.c.l.b16 %v279
    %v998 = vunpack.c.h.b16 %v279
    %v999 = vunpack.c.l.b16 %v280
    %v1000 = vunpack.c.h.b16 %v280
    %v1001 = vunpack.c.l.b16 %v281
    %v1002 = vunpack.c.h.b16 %v281
    %v1003 = vunpack.c.l.b16 %v282
    %v1004 = vunpack.c.h.b16 %v282
    %v1005 = vunpack.c.l.b16 %v283
    %v1006 = vunpack.c.h.b16 %v283
    %v1007 = vunpack.c.l.b16 %v284
    %v1008 = vunpack.c.h.b16 %v284
    %v1009 = vunpack.c.l.b16 %v285
    %v1010 = vunpack.c.h.b16 %v285
    %v1011 = vunpack.c.l.b16 %v286
    %v1012 = vunpack.c.h.b16 %v286
    %v1013 = vunpack.c.l.b16 %v287
    %v1014 = vunpack.c.h.b16 %v287
    %v1015 = vunpack.c.l.b16 %v288
    %v1016 = vunpack.c.h.b16 %v288
    %v1017 = vunpack.c.l.b16 %v289
    %v1018 = vunpack.c.h.b16 %v289
    %v1019 = vunpack.c.l.b16 %v290
    %v1020 = vunpack.c.h.b16 %v290
    %v1021 = vunpack.c.l.b16 %v291
    %v1022 = vunpack.c.h.b16 %v291
    %v1023 = vunpack.c.l.b16 %v292
    %v1024 = vunpack.c.h.b16 %v292
    %v1025 = vunpack.c.l.b16 %v293
    %v1026 = vunpack.c.h.b16 %v293
    %v1027 = vunpack.c.l.b16 %v294
    %v1028 = vunpack.c.h.b16 %v294
    %v1029 = vunpack.c.l.b16 %v295
    %v1030 = vunpack.c.h.b16 %v295
    %v1031 = vunpack.c.l.b16 %v296
    %v1032 = vunpack.c.h.b16 %v296
    %v1033 = vunpack.c.l.b16 %v297
    %v1034 = vunpack.c.h.b16 %v297
    %v1035 = vunpack.c.l.b16 %v298
    %v1036 = vunpack.c.h.b16 %v298
    %v1037 = vunpack.c.l.b16 %v299
    %v1038 = vunpack.c.h.b16 %v299
    %v1039 = vunpack.c.l.b16 %v300
    %v1040 = vunpack.c.h.b16 %v300
    %v1041 = vunpack.c.l.b16 %v301
    %v1042 = vunpack.c.h.b16 %v301
    %v1043 = vunpack.c.l.b16 %v302
    %v1044 = vunpack.c.h.b16 %v302
    %v1045 = vunpack.c.l.b16 %v303
    %v1046 = vunpack.c.h.b16 %v303
    %v1047 = vunpack.c.l.b16 %v304
    %v1048 = vunpack.c.h.b16 %v304
    %v1049 = vunpack.c.l.b16 %v305
    %v1050 = vunpack.c.h.b16 %v305
    %v1051 = vunpack.c.l.b16 %v306
    %v1052 = vunpack.c.h.b16 %v306
    %v1053 = vunpack.c.l.b16 %v307
    %v1054 = vunpack.c.h.b16 %v307
    %v1055 = vunpack.c.l.b16 %v308
    %v1056 = vunpack.c.h.b16 %v308
    %v1057 = vunpack.c.l.b16 %v309
    %v1058 = vunpack.c.h.b16 %v309
    %v1059 = vunpack.c.l.b16 %v310
    %v1060 = vunpack.c.h.b16 %v310
    %v1061 = vunpack.c.l.b16 %v311
    %v1062 = vunpack.c.h.b16 %v311
    %v1063 = vunpack.c.l.b16 %v312
    %v1064 = vunpack.c.h.b16 %v312
    %v1065 = vunpack.c.l.b16 %v313
    %v1066 = vunpack.c.h.b16 %v313
    %v1067 = vunpack.c.l.b16 %v314
    %v1068 = vunpack.c.h.b16 %v314
    %v1069 = vunpack.c.l.b16 %v315
    %v1070 = vunpack.c.h.b16 %v315
    %v1071 = vunpack.c.l.b16 %v316
    %v1072 = vunpack.c.h.b16 %v316
    %v1073 = vunpack.c.l.b16 %v317
    %v1074 = vunpack.c.h.b16 %v317
    %v1075 = vunpack.c.l.b16 %v318
    %v1076 = vunpack.c.h.b16 %v318
    %v1077 = vunpack.c.l.b16 %v319
    %v1078 = vunpack.c.h.b16 %v319
    %v1079 = vunpack.c.l.b16 %v320
    %v1080 = vunpack.c.h.b16 %v320
    %v1081 = vunpack.c.l.b16 %v321
    %v1082 = vunpack.c.h.b16 %v321
    %v1083 = vunpack.c.l.b16 %v322
    %v1084 = vunpack.c.h.b16 %v322
    %v1085 = vunpack.c.l.b16 %v323
    %v1086 = vunpack.c.h.b16 %v323
    %v1087 = vunpack.c.l.b16 %v324
    %v1088 = vunpack.c.h.b16 %v324
    %v1089 = vunpack.c.l.b16 %v325
    %v1090 = vunpack.c.h.b16 %v325
    %v1091 = vunpack.c.l.b16 %v326
    %v1092 = vunpack.c.h.b16 %v326
    %v1093 = vunpack.c.l.b16 %v327
    %v1094 = vunpack.c.h.b16 %v327
    %v1095 = vunpack.c.l.b16 %v328
    %v1096 = vunpack.c.h.b16 %v328
    %v1097 = vunpack.c.l.b16 %v329
    %v1098 = vunpack.c.h.b16 %v329
    %v1099 = vunpack.c.l.b16 %v330
    %v1100 = vunpack.c.h.b16 %v330
    %v1101 = vunpack.c.l.b16 %v331
    %v1102 = vunpack.c.h.b16 %v331
    %v1103 = vunpack.c.l.b16 %v332
    %v1104 = vunpack.c.h.b16 %v332
    %v1105 = vunpack.c.l.b16 %v333
    %v1106 = vunpack.c.h.b16 %v333
    %v1107 = vunpack.c.l.b16 %v334
    %v1108 = vunpack.c.h.b16 %v334
    %v1109 = vunpack.c.l.b16 %v335
    %v1110 = vunpack.c.h.b16 %v335
    %v1111 = vunpack.c.l.b16 %v336
    %v1112 = vunpack.c.h.b16 %v336
    %v1113 = vunpack.c.l.b16 %v337
    %v1114 = vunpack.c.h.b16 %v337
    %v1115 = vunpack.c.l.b16 %v338
    %v1116 = vunpack.c.h.b16 %v338
    %v1117 = vunpack.c.l.b16 %v339
    %v1118 = vunpack.c.h.b16 %v339
    %v1119 = vunpack.c.l.b16 %v340
    %v1120 = vunpack.c.h.b16 %v340
    %v1121 = vunpack.c.l.b16 %v341
    %v1122 = vunpack.c.h.b16 %v341
    %v1123 = vunpack.c.l.b16 %v342
    %v1124 = vunpack.c.h.b16 %v342
    %v1125 = vunpack.c.l.b16 %v343
    %v1126 = vunpack.c.h.b16 %v343
    %v1127 = vunpack.c.l.b16 %v344
    %v1128 = vunpack.c.h.b16 %v344
    %v1129 = vunpack.c.l.b16 %v345
    %v1130 = vunpack.c.h.b16 %v345
    %v1131 = vunpack.c.l.b16 %v346
    %v1132 = vunpack.c.h.b16 %v346
    %v1133 = vunpack.c.l.b16 %v347
    %v1134 = vunpack.c.h.b16 %v347
    %v1135 = vunpack.c.l.b16 %v348
    %v1136 = vunpack.c.h.b16 %v348
    %v1137 = vunpack.c.l.b16 %v349
    %v1138 = vunpack.c.h.b16 %v349
    %v1139 = vunpack.c.l.b16 %v350
    %v1140 = vunpack.c.h.b16 %v350
    %v1141 = vunpack.c.l.b16 %v351
    %v1142 = vunpack.c.h.b16 %v351
    %v1143 = vunpack.c.l.b16 %v352
    %v1144 = vunpack.c.h.b16 %v352
    %v1145 = vunpack.c.l.b16 %v353
    %v1146 = vunpack.c.h.b16 %v353
    %v1147 = vunpack.c.l.b16 %v354
    %v1148 = vunpack.c.h.b16 %v354
    %v1149 = vunpack.c.l.b16 %v355
    %v1150 = vunpack.c.h.b16 %v355
    %v1151 = vunpack.c.l.b16 %v356
    %v1152 = vunpack.c.h.b16 %v356
    %v1153 = vunpack.c.l.b16 %v357
    %v1154 = vunpack.c.h.b16 %v357
    %v1155 = vunpack.c.l.b16 %v358
    %v1156 = vunpack.c.h.b16 %v358
    %v1157 = vunpack.c.l.b16 %v359
    %v1158 = vunpack.c.h.b16 %v359
    %v1159 = vunpack.c.l.b16 %v360
    %v1160 = vunpack.c.h.b16 %v360
    %v1161 = vunpack.c.l.b16 %v361
    %v1162 = vunpack.c.h.b16 %v361
    %v1163 = vunpack.c.l.b16 %v362
    %v1164 = vunpack.c.h.b16 %v362
    %v1165 = vunpack.c.l.b16 %v363
    %v1166 = vunpack.c.h.b16 %v363
    %v1167 = vunpack.c.l.b16 %v364
    %v1168 = vunpack.c.h.b16 %v364
    %v1169 = vunpack.c.l.b16 %v365
    %v1170 = vunpack.c.h.b16 %v365
    %v1171 = vunpack.c.l.b16 %v366
    %v1172 = vunpack.c.h.b16 %v366
    %v1173 = vunpack.c.l.b16 %v367
    %v1174 = vunpack.c.h.b16 %v367
    %v1175 = vunpack.c.l.b16 %v368
    %v1176 = vunpack.c.h.b16 %v368
    %v1177 = vunpack.c.l.b16 %v369
    %v1178 = vunpack.c.h.b16 %v369
    %v1179 = vunpack.c.l.b16 %v370
    %v1180 = vunpack.c.h.b16 %v370
    %v1181 = vunpack.c.l.b16 %v371
    %v1182 = vunpack.c.h.b16 %v371
    %v1183 = vunpack.c.l.b16 %v372
    %v1184 = vunpack.c.h.b16 %v372
    %v1185 = vunpack.c.l.b16 %v373
    %v1186 = vunpack.c.h.b16 %v373
    %v1187 = vunpack.c.l.b16 %v374
    %v1188 = vunpack.c.h.b16 %v374
    %v1189 = vunpack.c.l.b16 %v375
    %v1190 = vunpack.c.h.b16 %v375
    %v1191 = vunpack.c.l.b16 %v376
    %v1192 = vunpack.c.h.b16 %v376
    %v1193 = vpack.c.b16 %v685, %v681
    %v1194 = vpack.c.b16 %v686, %v682
    %v1195 = vpack.c.b16 %v687, %v683
    %v1196 = vpack.c.b16 %v688, %v684
    %v1197 = vpack.c.b16 %v693, %v689
    %v1198 = vpack.c.b16 %v694, %v690
    %v1199 = vpack.c.b16 %v695, %v691
    %v1200 = vpack.c.b16 %v696, %v692
    %v1201 = vpack.c.b16 %v701, %v697
    %v1202 = vpack.c.b16 %v702, %v698
    %v1203 = vpack.c.b16 %v703, %v699
    %v1204 = vpack.c.b16 %v704, %v700
    %v1205 = vpack.c.b16 %v709, %v705
    %v1206 = vpack.c.b16 %v710, %v706
    %v1207 = vpack.c.b16 %v711, %v707
    %v1208 = vpack.c.b16 %v712, %v708
    %v1209 = vpack.c.b16 %v717, %v713
    %v1210 = vpack.c.b16 %v718, %v714
    %v1211 = vpack.c.b16 %v719, %v715
    %v1212 = vpack.c.b16 %v720, %v716
    %v1213 = vpack.c.b16 %v725, %v721
    %v1214 = vpack.c.b16 %v726, %v722
    %v1215 = vpack.c.b16 %v727, %v723
    %v1216 = vpack.c.b16 %v728, %v724
    %v1217 = vpack.c.b16 %v733, %v729
    %v1218 = vpack.c.b16 %v734, %v730
    %v1219 = vpack.c.b16 %v735, %v731
    %v1220 = vpack.c.b16 %v736, %v732
    %v1221 = vpack.c.b16 %v741, %v737
    %v1222 = vpack.c.b16 %v742, %v738
    %v1223 = vpack.c.b16 %v743, %v739
    %v1224 = vpack.c.b16 %v744, %v740
    %v1225 = vpack.c.b16 %v749, %v745
    %v1226 = vpack.c.b16 %v750, %v746
    %v1227 = vpack.c.b16 %v751, %v747
    %v1228 = vpack.c.b16 %v752, %v748
    %v1229 = vpack.c.b16 %v757, %v753
    %v1230 = vpack.c.b16 %v758, %v754
    %v1231 = vpack.c.b16 %v759, %v755
    %v1232 = vpack.c.b16 %v760, %v756
    %v1233 = vpack.c.b16 %v765, %v761
    %v1234 = vpack.c.b16 %v766, %v762
    %v1235 = vpack.c.b16 %v767, %v763
    %v1236 = vpack.c.b16 %v768, %v764
    %v1237 = vpack.c.b16 %v773, %v769
    %v1238 = vpack.c.b16 %v774, %v770
    %v1239 = vpack.c.b16 %v775, %v771
    %v1240 = vpack.c.b16 %v776, %v772
    %v1241 = vpack.c.b16 %v781, %v777
    %v1242 = vpack.c.b16 %v782, %v778
    %v1243 = vpack.c.b16 %v783, %v779
    %v1244 = vpack.c.b16 %v784, %v780
    %v1245 = vpack.c.b16 %v789, %v785
    %v1246 = vpack.c.b16 %v790, %v786
    %v1247 = vpack.c.b16 %v791, %v787
    %v1248 = vpack.c.b16 %v792, %v788
    %v1249 = vpack.c.b16 %v797, %v793
    %v1250 = vpack.c.b16 %v798, %v794
    %v1251 = vpack.c.b16 %v799, %v795
    %v1252 = vpack.c.b16 %v800, %v796
    %v1253 = vpack.c.b16 %v805, %v801
    %v1254 = vpack.c.b16 %v806, %v802
    %v1255 = vpack.c.b16 %v807, %v803
    %v1256 = vpack.c.b16 %v808, %v804
    %v1257 = vpack.c.b16 %v813, %v809
    %v1258 = vpack.c.b16 %v814, %v810
    %v1259 = vpack.c.b16 %v815, %v811
    %v1260 = vpack.c.b16 %v816, %v812
    %v1261 = vpack.c.b16 %v821, %v817
    %v1262 = vpack.c.b16 %v822, %v818
    %v1263 = vpack.c.b16 %v823, %v819
    %v1264 = vpack.c.b16 %v824, %v820
    %v1265 = vpack.c.b16 %v829, %v825
    %v1266 = vpack.c.b16 %v830, %v826
    %v1267 = vpack.c.b16 %v831, %v827
    %v1268 = vpack.c.b16 %v832, %v828
    %v1269 = vpack.c.b16 %v837, %v833
    %v1270 = vpack.c.b16 %v838, %v834
    %v1271 = vpack.c.b16 %v839, %v835
    %v1272 = vpack.c.b16 %v840, %v836
    %v1273 = vpack.c.b16 %v845, %v841
    %v1274 = vpack.c.b16 %v846, %v842
    %v1275 = vpack.c.b16 %v847, %v843
    %v1276 = vpack.c.b16 %v848, %v844
    %v1277 = vpack.c.b16 %v853, %v849
    %v1278 = vpack.c.b16 %v854, %v850
    %v1279 = vpack.c.b16 %v855, %v851
    %v1280 = vpack.c.b16 %v856, %v852
    %v1281 = vpack.c.b16 %v861, %v857
    %v1282 = vpack.c.b16 %v862, %v858
    %v1283 = vpack.c.b16 %v863, %v859
    %v1284 = vpack.c.b16 %v864, %v860
    %v1285 = vpack.c.b16 %v869, %v865
    %v1286 = vpack.c.b16 %v870, %v866
    %v1287 = vpack.c.b16 %v871, %v867
    %v1288 = vpack.c.b16 %v872, %v868
    %v1289 = vpack.c.b16 %v877, %v873
    %v1290 = vpack.c.b16 %v878, %v874
    %v1291 = vpack.c.b16 %v879, %v875
    %v1292 = vpack.c.b16 %v880, %v876
    %v1293 = vpack.c.b16 %v885, %v881
    %v1294 = vpack.c.b16 %v886, %v882
    %v1295 = vpack.c.b16 %v887, %v883
    %v1296 = vpack.c.b16 %v888, %v884
    %v1297 = vpack.c.b16 %v893, %v889
    %v1298 = vpack.c.b16 %v894, %v890
    %v1299 = vpack.c.b16 %v895, %v891
    %v1300 = vpack.c.b16 %v896, %v892
    %v1301 = vpack.c.b16 %v901, %v897
    %v1302 = vpack.c.b16 %v902, %v898
    %v1303 = vpack.c.b16 %v903, %v899
    %v1304 = vpack.c.b16 %v904, %v900
    %v1305 = vpack.c.b16 %v909, %v905
    %v1306 = vpack.c.b16 %v910, %v906
    %v1307 = vpack.c.b16 %v911, %v907
    %v1308 = vpack.c.b16 %v912, %v908
    %v1309 = vpack.c.b16 %v917, %v913
    %v1310 = vpack.c.b16 %v918, %v914
    %v1311 = vpack.c.b16 %v919, %v915
    %v1312 = vpack.c.b16 %v920, %v916
    %v1313 = vpack.c.b16 %v925, %v921
    %v1314 = vpack.c.b16 %v926, %v922
    %v1315 = vpack.c.b16 %v927, %v923
    %v1316 = vpack.c.b16 %v928, %v924
    %v1317 = vpack.c.b16 %v933, %v929
    %v1318 = vpack.c.b16 %v934, %v930
    %v1319 = vpack.c.b16 %v935, %v931
    %v1320 = vpack.c.b16 %v936, %v932
    %v1321 = vpack.c.b16 %v941, %v937
    %v1322 = vpack.c.b16 %v942, %v938
    %v1323 = vpack.c.b16 %v943, %v939
    %v1324 = vpack.c.b16 %v944, %v940
    %v1325 = vpack.c.b16 %v949, %v945
    %v1326 = vpack.c.b16 %v950, %v946
    %v1327 = vpack.c.b16 %v951, %v947
    %v1328 = vpack.c.b16 %v952, %v948
    %v1329 = vpack.c.b16 %v957, %v953
    %v1330 = vpack.c.b16 %v958, %v954
    %v1331 = vpack.c.b16 %v959, %v955
    %v1332 = vpack.c.b16 %v960, %v956
    %v1333 = vpack.c.b16 %v965, %v961
    %v1334 = vpack.c.b16 %v966, %v962
    %v1335 = vpack.c.b16 %v967, %v963
    %v1336 = vpack.c.b16 %v968, %v964
    %v1337 = vpack.c.b16 %v973, %v969
    %v1338 = vpack.c.b16 %v974, %v970
    %v1339 = vpack.c.b16 %v975, %v971
    %v1340 = vpack.c.b16 %v976, %v972
    %v1341 = vpack.c.b16 %v981, %v977
    %v1342 = vpack.c.b16 %v982, %v978
    %v1343 = vpack.c.b16 %v983, %v979
    %v1344 = vpack.c.b16 %v984, %v980
    %v1345 = vpack.c.b16 %v989, %v985
    %v1346 = vpack.c.b16 %v990, %v986
    %v1347 = vpack.c.b16 %v991, %v987
    %v1348 = vpack.c.b16 %v992, %v988
    %v1349 = vpack.c.b16 %v997, %v993
    %v1350 = vpack.c.b16 %v998, %v994
    %v1351 = vpack.c.b16 %v999, %v995
    %v1352 = vpack.c.b16 %v1000, %v996
    %v1353 = vpack.c.b16 %v1005, %v1001
    %v1354 = vpack.c.b16 %v1006, %v1002
    %v1355 = vpack.c.b16 %v1007, %v1003
    %v1356 = vpack.c.b16 %v1008, %v1004
    %v1357 = vpack.c.b16 %v1013, %v1009
    %v1358 = vpack.c.b16 %v1014, %v1010
    %v1359 = vpack.c.b16 %v1015, %v1011
    %v1360 = vpack.c.b16 %v1016, %v1012
    %v1361 = vpack.c.b16 %v1021, %v1017
    %v1362 = vpack.c.b16 %v1022, %v1018
    %v1363 = vpack.c.b16 %v1023, %v1019
    %v1364 = vpack.c.b16 %v1024, %v1020
    %v1365 = vpack.c.b16 %v1029, %v1025
    %v1366 = vpack.c.b16 %v1030, %v1026
    %v1367 = vpack.c.b16 %v1031, %v1027
    %v1368 = vpack.c.b16 %v1032, %v1028
    %v1369 = vpack.c.b16 %v1037, %v1033
    %v1370 = vpack.c.b16 %v1038, %v1034
    %v1371 = vpack.c.b16 %v1039, %v1035
    %v1372 = vpack.c.b16 %v1040, %v1036
    %v1373 = vpack.c.b16 %v1045, %v1041
    %v1374 = vpack.c.b16 %v1046, %v1042
    %v1375 = vpack.c.b16 %v1047, %v1043
    %v1376 = vpack.c.b16 %v1048, %v1044
    %v1377 = vpack.c.b16 %v1053, %v1049
    %v1378 = vpack.c.b16 %v1054, %v1050
    %v1379 = vpack.c.b16 %v1055, %v1051
    %v1380 = vpack.c.b16 %v1056, %v1052
    %v1381 = vpack.c.b16 %v1061, %v1057
    %v1382 = vpack.c.b16 %v1062, %v1058
    %v1383 = vpack.c.b16 %v1063, %v1059
    %v1384 = vpack.c.b16 %v1064, %v1060
    %v1385 = vpack.c.b16 %v1069, %v1065
    %v1386 = vpack.c.b16 %v1070, %v1066
    %v1387 = vpack.c.b16 %v1071, %v1067
    %v1388 = vpack.c.b16 %v1072, %v1068
    %v1389 = vpack.c.b16 %v1077, %v1073
    %v1390 = vpack.c.b16 %v1078, %v1074
    %v1391 = vpack.c.b16 %v1079, %v1075
    %v1392 = vpack.c.b16 %v1080, %v1076
    %v1393 = vpack.c.b16 %v1085, %v1081
    %v1394 = vpack.c.b16 %v1086, %v1082
    %v1395 = vpack.c.b16 %v1087, %v1083
    %v1396 = vpack.c.b16 %v1088, %v1084
    %v1397 = vpack.c.b16 %v1093, %v1089
    %v1398 = vpack.c.b16 %v1094, %v1090
    %v1399 = vpack.c.b16 %v1095, %v1091
    %v1400 = vpack.c.b16 %v1096, %v1092
    %v1401 = vpack.c.b16 %v1101, %v1097
    %v1402 = vpack.c.b16 %v1102, %v1098
    %v1403 = vpack.c.b16 %v1103, %v1099
    %v1404 = vpack.c.b16 %v1104, %v1100
    %v1405 = vpack.c.b16 %v1109, %v1105
    %v1406 = vpack.c.b16 %v1110, %v1106
    %v1407 = vpack.c.b16 %v1111, %v1107
    %v1408 = vpack.c.b16 %v1112, %v1108
    %v1409 = vpack.c.b16 %v1117, %v1113
    %v1410 = vpack.c.b16 %v1118, %v1114
    %v1411 = vpack.c.b16 %v1119, %v1115
    %v1412 = vpack.c.b16 %v1120, %v1116
    %v1413 = vpack.c.b16 %v1125, %v1121
    %v1414 = vpack.c.b16 %v1126, %v1122
    %v1415 = vpack.c.b16 %v1127, %v1123
    %v1416 = vpack.c.b16 %v1128, %v1124
    %v1417 = vpack.c.b16 %v1133, %v1129
    %v1418 = vpack.c.b16 %v1134, %v1130
    %v1419 = vpack.c.b16 %v1135, %v1131
    %v1420 = vpack.c.b16 %v1136, %v1132
    %v1421 = vpack.c.b16 %v1141, %v1137
    %v1422 = vpack.c.b16 %v1142, %v1138
    %v1423 = vpack.c.b16 %v1143, %v1139
    %v1424 = vpack.c.b16 %v1144, %v1140
    %v1425 = vpack.c.b16 %v1149, %v1145
    %v1426 = vpack.c.b16 %v1150, %v1146
    %v1427 = vpack.c.b16 %v1151, %v1147
    %v1428 = vpack.c.b16 %v1152, %v1148
    %v1429 = vpack.c.b16 %v1157, %v1153
    %v1430 = vpack.c.b16 %v1158, %v1154
    %v1431 = vpack.c.b16 %v1159, %v1155
    %v1432 = vpack.c.b16 %v1160, %v1156
    %v1433 = vpack.c.b16 %v1165, %v1161
    %v1434 = vpack.c.b16 %v1166, %v1162
    %v1435 = vpack.c.b16 %v1167, %v1163
    %v1436 = vpack.c.b16 %v1168, %v1164
    %v1437 = vpack.c.b16 %v1173, %v1169
    %v1438 = vpack.c.b16 %v1174, %v1170
    %v1439 = vpack.c.b16 %v1175, %v1171
    %v1440 = vpack.c.b16 %v1176, %v1172
    %v1441 = vpack.c.b16 %v1181, %v1177
    %v1442 = vpack.c.b16 %v1182, %v1178
    %v1443 = vpack.c.b16 %v1183, %v1179
    %v1444 = vpack.c.b16 %v1184, %v1180
    %v1445 = vpack.c.b16 %v1189, %v1185
    %v1446 = vpack.c.b16 %v1190, %v1186
    %v1447 = vpack.c.b16 %v1191, %v1187
    %v1448 = vpack.c.b16 %v1192, %v1188
    %vm1701 = vcmask 1031168
    %v1703 = vsel %vm1701, %v120, 0
    %vm1705 = vcmask 1046528
    %v1707 = vsel %vm1705, %v1445, 0
    %v1710 = vsel %vm1705, %v1446, 0
    %v1713 = vsel %vm1705, %v1447, 0
    %v1716 = vsel %vm1705, %v1448, 0
    %1718 = vmatprep.subr.bf16.mxu0 %v1194
    %1719 = vmatpush1.bf16.msra.mxu0 %v1193
    %1720 = vmatprep.subr.bf16.mxu0 %v1198
    %1721 = vmatpush1.bf16.msra.mxu0 %v1197
    %1722 = vmatprep.subr.bf16.mxu0 %v1202
    %1723 = vmatpush1.bf16.msra.mxu0 %v1201
    %1724 = vmatprep.subr.bf16.mxu0 %v1206
    %1725 = vmatpush1.bf16.msra.mxu0 %v1205
    %1726 = vmatprep.subr.bf16.mxu0 %v1210
    %1727 = vmatpush1.bf16.msra.mxu0 %v1209
    %1728 = vmatprep.subr.bf16.mxu0 %v1214
    %1729 = vmatpush1.bf16.msra.mxu0 %v1213
    %1730 = vmatprep.subr.bf16.mxu0 %v1218
    %1731 = vmatpush1.bf16.msra.mxu0 %v1217
    %1732 = vmatprep.subr.bf16.mxu0 %v1222
    %1733 = vmatpush1.bf16.msra.mxu0 %v1221
    %1734 = vmatprep.subr.bf16.mxu0 %v1226
    %1735 = vmatpush1.bf16.msra.mxu0 %v1225
    %1736 = vmatprep.subr.bf16.mxu0 %v1230
    %1737 = vmatpush1.bf16.msra.mxu0 %v1229
    %1738 = vmatprep.subr.bf16.mxu0 %v1234
    %1739 = vmatpush1.bf16.msra.mxu0 %v1233
    %1740 = vmatprep.subr.bf16.mxu0 %v1238
    %1741 = vmatpush1.bf16.msra.mxu0 %v1237
    %1742 = vmatprep.subr.bf16.mxu0 %v1242
    %1743 = vmatpush1.bf16.msra.mxu0 %v1241
    %1744 = vmatprep.subr.bf16.mxu0 %v1246
    %1745 = vmatpush1.bf16.msra.mxu0 %v1245
    %1746 = vmatprep.subr.bf16.mxu0 %v1250
    %1747 = vmatpush1.bf16.msra.mxu0 %v1249
    %1748 = vmatprep.subr.bf16.mxu0 %v1254
    %1749 = vmatpush1.bf16.msra.mxu0 %v1253
    %1750 = vmatprep.mubr.bf16.mxu0 %v114
    %1751 = vmatmul.mubr.bf16.gmra.mrb[0].mxu0 %v113
    %v1752 = vpop.f32.mrb[0].mxu0
    %v1753 = vadd.f32 %v421, %v1752
    %v1754 = vpop.f32.mrb[0].mxu0
    %v1755 = vadd.f32 %v422, %v1754
    %v1756 = vpop.f32.mrb[0].mxu0
    %v1757 = vpop.f32.mrb[0].mxu0
    %1758 = vdwg.mxu0
    %1759 = vmatprep.subr.bf16.mxu0 %v1258
    %1760 = vmatpush1.bf16.msra.mxu0 %v1257
    %1761 = vmatprep.subr.bf16.mxu0 %v1262
    %1762 = vmatpush1.bf16.msra.mxu0 %v1261
    %1763 = vmatprep.subr.bf16.mxu0 %v1266
    %1764 = vmatpush1.bf16.msra.mxu0 %v1265
    %1765 = vmatprep.subr.bf16.mxu0 %v1270
    %1766 = vmatpush1.bf16.msra.mxu0 %v1269
    %1767 = vmatprep.subr.bf16.mxu0 %v1274
    %1768 = vmatpush1.bf16.msra.mxu0 %v1273
    %1769 = vmatprep.subr.bf16.mxu0 %v1278
    %1770 = vmatpush1.bf16.msra.mxu0 %v1277
    %1771 = vmatprep.subr.bf16.mxu0 %v1282
    %1772 = vmatpush1.bf16.msra.mxu0 %v1281
    %1773 = vmatprep.subr.bf16.mxu0 %v1286
    %1774 = vmatpush1.bf16.msra.mxu0 %v1285
    %1775 = vmatprep.subr.bf16.mxu0 %v1290
    %1776 = vmatpush1.bf16.msra.mxu0 %v1289
    %1777 = vmatprep.subr.bf16.mxu0 %v1294
    %1778 = vmatpush1.bf16.msra.mxu0 %v1293
    %1779 = vmatprep.subr.bf16.mxu0 %v1298
    %1780 = vmatpush1.bf16.msra.mxu0 %v1297
    %1781 = vmatprep.subr.bf16.mxu0 %v1302
    %1782 = vmatpush1.bf16.msra.mxu0 %v1301
    %1783 = vmatprep.subr.bf16.mxu0 %v1306
    %1784 = vmatpush1.bf16.msra.mxu0 %v1305
    %1785 = vmatprep.subr.bf16.mxu0 %v1310
    %1786 = vmatpush1.bf16.msra.mxu0 %v1309
    %1787 = vmatprep.subr.bf16.mxu0 %v1314
    %1788 = vmatpush1.bf16.msra.mxu0 %v1313
    %1789 = vmatprep.subr.bf16.mxu0 %v1318
    %1790 = vmatpush1.bf16.msra.mxu0 %v1317
    %1791 = vmatprep.mubr.bf16.mxu0 %v116
    %1792 = vmatmul.mubr.bf16.gmra.mrb[0].mxu0 %v115
    %v1793 = vpop.f32.mrb[0].mxu0
    %v1794 = vadd.f32 %v1753, %v1793
    %v1795 = vpop.f32.mrb[0].mxu0
    %v1796 = vadd.f32 %v1755, %v1795
    %v1797 = vpop.f32.mrb[0].mxu0
    %v1798 = vpop.f32.mrb[0].mxu0
    %1799 = vdwg.mxu0
    %1800 = vmatprep.subr.bf16.mxu0 %v1322
    %1801 = vmatpush1.bf16.msra.mxu0 %v1321
    %1802 = vmatprep.subr.bf16.mxu0 %v1326
    %1803 = vmatpush1.bf16.msra.mxu0 %v1325
    %1804 = vmatprep.subr.bf16.mxu0 %v1330
    %1805 = vmatpush1.bf16.msra.mxu0 %v1329
    %1806 = vmatprep.subr.bf16.mxu0 %v1334
    %1807 = vmatpush1.bf16.msra.mxu0 %v1333
    %1808 = vmatprep.subr.bf16.mxu0 %v1338
    %1809 = vmatpush1.bf16.msra.mxu0 %v1337
    %1810 = vmatprep.subr.bf16.mxu0 %v1342
    %1811 = vmatpush1.bf16.msra.mxu0 %v1341
    %1812 = vmatprep.subr.bf16.mxu0 %v1346
    %1813 = vmatpush1.bf16.msra.mxu0 %v1345
    %1814 = vmatprep.subr.bf16.mxu0 %v1350
    %1815 = vmatpush1.bf16.msra.mxu0 %v1349
    %1816 = vmatprep.subr.bf16.mxu0 %v1354
    %1817 = vmatpush1.bf16.msra.mxu0 %v1353
    %1818 = vmatprep.subr.bf16.mxu0 %v1358
    %1819 = vmatpush1.bf16.msra.mxu0 %v1357
    %1820 = vmatprep.subr.bf16.mxu0 %v1362
    %1821 = vmatpush1.bf16.msra.mxu0 %v1361
    %1822 = vmatprep.subr.bf16.mxu0 %v1366
    %1823 = vmatpush1.bf16.msra.mxu0 %v1365
    %1824 = vmatprep.subr.bf16.mxu0 %v1370
    %1825 = vmatpush1.bf16.msra.mxu0 %v1369
    %1826 = vmatprep.subr.bf16.mxu0 %v1374
    %1827 = vmatpush1.bf16.msra.mxu0 %v1373
    %1828 = vmatprep.subr.bf16.mxu0 %v1378
    %1829 = vmatpush1.bf16.msra.mxu0 %v1377
    %1830 = vmatprep.subr.bf16.mxu0 %v1382
    %1831 = vmatpush1.bf16.msra.mxu0 %v1381
    %1832 = vmatprep.mubr.bf16.mxu0 %v118
    %1833 = vmatmul.mubr.bf16.gmra.mrb[0].mxu0 %v117
    %v1834 = vpop.f32.mrb[0].mxu0
    %v1835 = vadd.f32 %v1794, %v1834
    %v1836 = vpop.f32.mrb[0].mxu0
    %v1837 = vadd.f32 %v1796, %v1836
    %v1838 = vpop.f32.mrb[0].mxu0
    %v1839 = vpop.f32.mrb[0].mxu0
    %1840 = vdwg.mxu0
    %1841 = vmatprep.subr.bf16.mxu0 %v1386
    %1842 = vmatpush1.bf16.msra.mxu0 %v1385
    %1843 = vmatprep.subr.bf16.mxu0 %v1390
    %1844 = vmatpush1.bf16.msra.mxu0 %v1389
    %1845 = vmatprep.subr.bf16.mxu0 %v1394
    %1846 = vmatpush1.bf16.msra.mxu0 %v1393
    %1847 = vmatprep.subr.bf16.mxu0 %v1398
    %1848 = vmatpush1.bf16.msra.mxu0 %v1397
    %1849 = vmatprep.subr.bf16.mxu0 %v1402
    %1850 = vmatpush1.bf16.msra.mxu0 %v1401
    %1851 = vmatprep.subr.bf16.mxu0 %v1406
    %1852 = vmatpush1.bf16.msra.mxu0 %v1405
    %1853 = vmatprep.subr.bf16.mxu0 %v1410
    %1854 = vmatpush1.bf16.msra.mxu0 %v1409
    %1855 = vmatprep.subr.bf16.mxu0 %v1414
    %1856 = vmatpush1.bf16.msra.mxu0 %v1413
    %1857 = vmatprep.subr.bf16.mxu0 %v1418
    %1858 = vmatpush1.bf16.msra.mxu0 %v1417
    %1859 = vmatprep.subr.bf16.mxu0 %v1422
    %1860 = vmatpush1.bf16.msra.mxu0 %v1421
    %1861 = vmatprep.subr.bf16.mxu0 %v1426
    %1862 = vmatpush1.bf16.msra.mxu0 %v1425
    %1863 = vmatprep.subr.bf16.mxu0 %v1430
    %1864 = vmatpush1.bf16.msra.mxu0 %v1429
    %1865 = vmatprep.subr.bf16.mxu0 %v1434
    %1866 = vmatpush1.bf16.msra.mxu0 %v1433
    %1867 = vmatprep.subr.bf16.mxu0 %v1438
    %1868 = vmatpush1.bf16.msra.mxu0 %v1437
    %1869 = vmatprep.subr.bf16.mxu0 %v1442
    %1870 = vmatpush1.bf16.msra.mxu0 %v1441
    %1871 = vmatprep.subr.bf16.mxu0 %v1710
    %1872 = vmatpush1.bf16.msra.mxu0 %v1707
    %1873 = vmatprep.mubr.bf16.mxu0 %v1703
    %1874 = vmatmul.mubr.bf16.gmra.mrb[0].mxu0 %v119
    %v1875 = vpop.f32.mrb[0].mxu0
    %v1876 = vadd.f32 %v1835, %v1875
    %v1877 = vpop.f32.mrb[0].mxu0
    %v1878 = vadd.f32 %v1837, %v1877
    %v1879 = vpop.f32.mrb[0].mxu0
    %v1880 = vpop.f32.mrb[0].mxu0
    %1881 = vdwg.mxu0
    %1882 = vmatprep.subr.bf16.mxu0 %v1196
    %1883 = vmatpush1.bf16.msra.mxu0 %v1195
    %1884 = vmatprep.subr.bf16.mxu0 %v1200
    %1885 = vmatpush1.bf16.msra.mxu0 %v1199
    %1886 = vmatprep.subr.bf16.mxu0 %v1204
    %1887 = vmatpush1.bf16.msra.mxu0 %v1203
    %1888 = vmatprep.subr.bf16.mxu0 %v1208
    %1889 = vmatpush1.bf16.msra.mxu0 %v1207
    %1890 = vmatprep.subr.bf16.mxu0 %v1212
    %1891 = vmatpush1.bf16.msra.mxu0 %v1211
    %1892 = vmatprep.subr.bf16.mxu0 %v1216
    %1893 = vmatpush1.bf16.msra.mxu0 %v1215
    %1894 = vmatprep.subr.bf16.mxu0 %v1220
    %1895 = vmatpush1.bf16.msra.mxu0 %v1219
    %1896 = vmatprep.subr.bf16.mxu0 %v1224
    %1897 = vmatpush1.bf16.msra.mxu0 %v1223
    %1898 = vmatprep.subr.bf16.mxu0 %v1228
    %1899 = vmatpush1.bf16.msra.mxu0 %v1227
    %1900 = vmatprep.subr.bf16.mxu0 %v1232
    %1901 = vmatpush1.bf16.msra.mxu0 %v1231
    %1902 = vmatprep.subr.bf16.mxu0 %v1236
    %1903 = vmatpush1.bf16.msra.mxu0 %v1235
    %1904 = vmatprep.subr.bf16.mxu0 %v1240
    %1905 = vmatpush1.bf16.msra.mxu0 %v1239
    %1906 = vmatprep.subr.bf16.mxu0 %v1244
    %1907 = vmatpush1.bf16.msra.mxu0 %v1243
    %1908 = vmatprep.subr.bf16.mxu0 %v1248
    %1909 = vmatpush1.bf16.msra.mxu0 %v1247
    %1910 = vmatprep.subr.bf16.mxu0 %v1252
    %1911 = vmatpush1.bf16.msra.mxu0 %v1251
    %1912 = vmatprep.subr.bf16.mxu0 %v1256
    %1913 = vmatpush1.bf16.msra.mxu0 %v1255
    %1914 = vmatprep.mubr.bf16.mxu0 %v114
    %1915 = vmatmul.mubr.bf16.gmra.mrb[0].mxu0 %v113
    %v1916 = vpop.f32.mrb[0].mxu0
    %v1917 = vadd.f32 %v423, %v1916
    %v1918 = vpop.f32.mrb[0].mxu0
    %v1919 = vadd.f32 %v424, %v1918
    %v1920 = vpop.f32.mrb[0].mxu0
    %v1921 = vpop.f32.mrb[0].mxu0
    %1922 = vdwg.mxu0
    %1923 = vmatprep.subr.bf16.mxu0 %v1260
    %1924 = vmatpush1.bf16.msra.mxu0 %v1259
    %1925 = vmatprep.subr.bf16.mxu0 %v1264
    %1926 = vmatpush1.bf16.msra.mxu0 %v1263
    %1927 = vmatprep.subr.bf16.mxu0 %v1268
    %1928 = vmatpush1.bf16.msra.mxu0 %v1267
    %1929 = vmatprep.subr.bf16.mxu0 %v1272
    %1930 = vmatpush1.bf16.msra.mxu0 %v1271
    %1931 = vmatprep.subr.bf16.mxu0 %v1276
    %1932 = vmatpush1.bf16.msra.mxu0 %v1275
    %1933 = vmatprep.subr.bf16.mxu0 %v1280
    %1934 = vmatpush1.bf16.msra.mxu0 %v1279
    %1935 = vmatprep.subr.bf16.mxu0 %v1284
    %1936 = vmatpush1.bf16.msra.mxu0 %v1283
    %1937 = vmatprep.subr.bf16.mxu0 %v1288
    %1938 = vmatpush1.bf16.msra.mxu0 %v1287
    %1939 = vmatprep.subr.bf16.mxu0 %v1292
    %1940 = vmatpush1.bf16.msra.mxu0 %v1291
    %1941 = vmatprep.subr.bf16.mxu0 %v1296
    %1942 = vmatpush1.bf16.msra.mxu0 %v1295
    %1943 = vmatprep.subr.bf16.mxu0 %v1300
    %1944 = vmatpush1.bf16.msra.mxu0 %v1299
    %1945 = vmatprep.subr.bf16.mxu0 %v1304
    %1946 = vmatpush1.bf16.msra.mxu0 %v1303
    %1947 = vmatprep.subr.bf16.mxu0 %v1308
    %1948 = vmatpush1.bf16.msra.mxu0 %v1307
    %1949 = vmatprep.subr.bf16.mxu0 %v1312
    %1950 = vmatpush1.bf16.msra.mxu0 %v1311
    %1951 = vmatprep.subr.bf16.mxu0 %v1316
    %1952 = vmatpush1.bf16.msra.mxu0 %v1315
    %1953 = vmatprep.subr.bf16.mxu0 %v1320
    %1954 = vmatpush1.bf16.msra.mxu0 %v1319
    %1955 = vmatprep.mubr.bf16.mxu0 %v116
    %1956 = vmatmul.mubr.bf16.gmra.mrb[0].mxu0 %v115
    %v1957 = vpop.f32.mrb[0].mxu0
    %v1958 = vadd.f32 %v1917, %v1957
    %v1959 = vpop.f32.mrb[0].mxu0
    %v1960 = vadd.f32 %v1919, %v1959
    %v1961 = vpop.f32.mrb[0].mxu0
    %v1962 = vpop.f32.mrb[0].mxu0
    %1963 = vdwg.mxu0
    %1964 = vmatprep.subr.bf16.mxu0 %v1324
    %1965 = vmatpush1.bf16.msra.mxu0 %v1323
    %1966 = vmatprep.subr.bf16.mxu0 %v1328
    %1967 = vmatpush1.bf16.msra.mxu0 %v1327
    %1968 = vmatprep.subr.bf16.mxu0 %v1332
    %1969 = vmatpush1.bf16.msra.mxu0 %v1331
    %1970 = vmatprep.subr.bf16.mxu0 %v1336
    %1971 = vmatpush1.bf16.msra.mxu0 %v1335
    %1972 = vmatprep.subr.bf16.mxu0 %v1340
    %1973 = vmatpush1.bf16.msra.mxu0 %v1339
    %1974 = vmatprep.subr.bf16.mxu0 %v1344
    %1975 = vmatpush1.bf16.msra.mxu0 %v1343
    %1976 = vmatprep.subr.bf16.mxu0 %v1348
    %1977 = vmatpush1.bf16.msra.mxu0 %v1347
    %1978 = vmatprep.subr.bf16.mxu0 %v1352
    %1979 = vmatpush1.bf16.msra.mxu0 %v1351
    %1980 = vmatprep.subr.bf16.mxu0 %v1356
    %1981 = vmatpush1.bf16.msra.mxu0 %v1355
    %1982 = vmatprep.subr.bf16.mxu0 %v1360
    %1983 = vmatpush1.bf16.msra.mxu0 %v1359
    %1984 = vmatprep.subr.bf16.mxu0 %v1364
    %1985 = vmatpush1.bf16.msra.mxu0 %v1363
    %1986 = vmatprep.subr.bf16.mxu0 %v1368
    %1987 = vmatpush1.bf16.msra.mxu0 %v1367
    %1988 = vmatprep.subr.bf16.mxu0 %v1372
    %1989 = vmatpush1.bf16.msra.mxu0 %v1371
    %1990 = vmatprep.subr.bf16.mxu0 %v1376
    %1991 = vmatpush1.bf16.msra.mxu0 %v1375
    %1992 = vmatprep.subr.bf16.mxu0 %v1380
    %1993 = vmatpush1.bf16.msra.mxu0 %v1379
    %1994 = vmatprep.subr.bf16.mxu0 %v1384
    %1995 = vmatpush1.bf16.msra.mxu0 %v1383
    %1996 = vmatprep.mubr.bf16.mxu0 %v118
    %1997 = vmatmul.mubr.bf16.gmra.mrb[0].mxu0 %v117
    %v1998 = vpop.f32.mrb[0].mxu0
    %v1999 = vadd.f32 %v1958, %v1998
    %v2000 = vpop.f32.mrb[0].mxu0
    %v2001 = vadd.f32 %v1960, %v2000
    %v2002 = vpop.f32.mrb[0].mxu0
    %v2003 = vpop.f32.mrb[0].mxu0
    %2004 = vdwg.mxu0
    %2005 = vmatprep.subr.bf16.mxu0 %v1388
    %2006 = vmatpush1.bf16.msra.mxu0 %v1387
    %2007 = vmatprep.subr.bf16.mxu0 %v1392
    %2008 = vmatpush1.bf16.msra.mxu0 %v1391
    %2009 = vmatprep.subr.bf16.mxu0 %v1396
    %2010 = vmatpush1.bf16.msra.mxu0 %v1395
    %2011 = vmatprep.subr.bf16.mxu0 %v1400
    %2012 = vmatpush1.bf16.msra.mxu0 %v1399
    %2013 = vmatprep.subr.bf16.mxu0 %v1404
    %2014 = vmatpush1.bf16.msra.mxu0 %v1403
    %2015 = vmatprep.subr.bf16.mxu0 %v1408
    %2016 = vmatpush1.bf16.msra.mxu0 %v1407
    %2017 = vmatprep.subr.bf16.mxu0 %v1412
    %2018 = vmatpush1.bf16.msra.mxu0 %v1411
    %2019 = vmatprep.subr.bf16.mxu0 %v1416
    %2020 = vmatpush1.bf16.msra.mxu0 %v1415
    %2021 = vmatprep.subr.bf16.mxu0 %v1420
    %2022 = vmatpush1.bf16.msra.mxu0 %v1419
    %2023 = vmatprep.subr.bf16.mxu0 %v1424
    %2024 = vmatpush1.bf16.msra.mxu0 %v1423
    %2025 = vmatprep.subr.bf16.mxu0 %v1428
    %2026 = vmatpush1.bf16.msra.mxu0 %v1427
    %2027 = vmatprep.subr.bf16.mxu0 %v1432
    %2028 = vmatpush1.bf16.msra.mxu0 %v1431
    %2029 = vmatprep.subr.bf16.mxu0 %v1436
    %2030 = vmatpush1.bf16.msra.mxu0 %v1435
    %2031 = vmatprep.subr.bf16.mxu0 %v1440
    %2032 = vmatpush1.bf16.msra.mxu0 %v1439
    %2033 = vmatprep.subr.bf16.mxu0 %v1444
    %2034 = vmatpush1.bf16.msra.mxu0 %v1443
    %2035 = vmatprep.subr.bf16.mxu0 %v1716
    %2036 = vmatpush1.bf16.msra.mxu0 %v1713
    %2037 = vmatprep.mubr.bf16.mxu0 %v1703
    %2038 = vmatmul.mubr.bf16.gmra.mrb[0].mxu0 %v119
    %v2039 = vpop.f32.mrb[0].mxu0
    %v2040 = vadd.f32 %v1999, %v2039
    %v2041 = vpop.f32.mrb[0].mxu0
    %v2042 = vadd.f32 %v2001, %v2041
    %v2043 = vpop.f32.mrb[0].mxu0
    %v2044 = vpop.f32.mrb[0].mxu0
    %2045 = vdwg.mxu0
    %2046 = vset.pattern.permute.xlu0 1
    %2047 = vperm.xlu0 %2046, %v377
    %v2048 = vpop.permute.xlu0 %2047
    %v2050 = vlaneseq
    %v2051 = vshrl.u32 %v2050, 7
    %v2052 = vsub.s32 1, %v2051
    %v2053 = vrot.slane %v378, %v2052
    %v2054 = vlaneseq
    %v2055 = vshrl.u32 %v2054, 7
    %v2056 = vsub.s32 3, %v2055
    %v2057 = vrot.slane %v378, %v2056
    %v2058 = vlaneseq
    %v2059 = vshrl.u32 %v2058, 7
    %v2060 = vsub.s32 5, %v2059
    %v2061 = vrot.slane %v378, %v2060
    %v2062 = vlaneseq
    %v2063 = vshrl.u32 %v2062, 7
    %v2064 = vsub.s32 7, %v2063
    %v2065 = vrot.slane %v378, %v2064
    %v2070 = vlaneseq
    %v2071 = vshrl.u32 %v2070, 7
    %v2072 = vsub.s32 1, %v2071
    %v2073 = vrot.slane %v2053, %v2072
    %v2074 = vlaneseq
    %v2075 = vshrl.u32 %v2074, 7
    %v2076 = vsub.s32 1, %v2075
    %v2077 = vrot.slane %v2057, %v2076
    %v2078 = vlaneseq
    %v2079 = vshrl.u32 %v2078, 7
    %v2080 = vsub.s32 1, %v2079
    %v2081 = vrot.slane %v2061, %v2080
    %v2082 = vlaneseq
    %v2083 = vshrl.u32 %v2082, 7
    %v2084 = vsub.s32 1, %v2083
    %v2085 = vrot.slane %v2065, %v2084
    %v2086 = vmul.f32 %v2048, %v2073
    %v2087 = vmul.f32 %v2048, %v2077
    %v2088 = vmul.f32 %v2048, %v2081
    %v2089 = vmul.f32 %v2048, %v2085
    %v2090 = vadd.f32 %v1876, %v2086
    %v2091 = vadd.f32 %v1878, %v2087
    %v2092 = vadd.f32 %v2040, %v2088
    %v2093 = vadd.f32 %v2042, %v2089
    %v2094 = vld [vmem:[%s4] sm:$0xf]
    %v2096 = vlaneseq
    %v2097 = vshrl.u32 %v2096, 7
    %v2098 = vsub.s32 0, %v2097
    %v2099 = vrot.slane %v2094, %v2098
    %v2100 = vlaneseq
    %v2101 = vshrl.u32 %v2100, 7
    %v2102 = vsub.s32 1, %v2101
    %v2103 = vrot.slane %v2094, %v2102
    %v2104 = vlaneseq
    %v2105 = vshrl.u32 %v2104, 7
    %v2106 = vsub.s32 2, %v2105
    %v2107 = vrot.slane %v2094, %v2106
    %v2108 = vlaneseq
    %v2109 = vshrl.u32 %v2108, 7
    %v2110 = vsub.s32 3, %v2109
    %v2111 = vrot.slane %v2094, %v2110
    %v2116 = vadd.f32 %v2090, %v2099
    %v2117 = vadd.f32 %v2091, %v2103
    %v2118 = vadd.f32 %v2092, %v2107
    %v2119 = vadd.f32 %v2093, %v2111
    %v2120 = vtanh.pop %v2116
    %v2121 = vtanh.pop %v2117
    %v2122 = vtanh.pop %v2118
    %v2123 = vtanh.pop %v2119
    %v2124 = vpack.c.bf16 %v2120, %v2120
    %v2125 = vpack.c.bf16 %v2121, %v2121
    %v2126 = vpack.c.bf16 %v2122, %v2122
    %v2127 = vpack.c.bf16 %v2123, %v2123
    %v2128 = vld [vmem:[#allocation7] sm:$0xf]
    %v2129 = vld [vmem:[#allocation7 + $0x4] sm:$0xf]
    %v2130 = vld [vmem:[#allocation7 + $0x8] sm:$0xf]
    %v2131 = vld [vmem:[#allocation7 + $0xc] sm:$0xf]
    %v2132 = vld [vmem:[#allocation7 + $0x10] sm:$0xf]
    %v2133 = vld [vmem:[#allocation7 + $0x14] sm:$0xf]
    %v2134 = vld [vmem:[#allocation7 + $0x18] sm:$0xf]
    %v2135 = vld [vmem:[#allocation7 + $0x1c] sm:$0xf]
    %v2136 = vld [vmem:[#allocation7 + $0x20] sm:$0xf]
    %v2137 = vld [vmem:[#allocation7 + $0x24] sm:$0xf]
    %v2138 = vld [vmem:[#allocation7 + $0x28] sm:$0xf]
    %v2139 = vld [vmem:[#allocation7 + $0x2c] sm:$0xf]
    %v2140 = vld [vmem:[#allocation7 + $0x30] sm:$0xf]
    %v2141 = vld [vmem:[#allocation7 + $0x34] sm:$0xf]
    %v2142 = vld [vmem:[#allocation7 + $0x38] sm:$0xf]
    %v2143 = vld [vmem:[#allocation7 + $0x3c] sm:$0xf]
    %v2144 = vld [vmem:[#allocation7 + $0x40] sm:$0xf]
    %v2145 = vld [vmem:[#allocation7 + $0x44] sm:$0xf]
    %v2146 = vld [vmem:[#allocation7 + $0x48] sm:$0xf]
    %v2147 = vld [vmem:[#allocation7 + $0x4c] sm:$0xf]
    %v2148 = vld [vmem:[#allocation7 + $0x50] sm:$0xf]
    %v2149 = vld [vmem:[#allocation7 + $0x54] sm:$0xf]
    %v2150 = vld [vmem:[#allocation7 + $0x58] sm:$0xf]
    %v2151 = vld [vmem:[#allocation7 + $0x5c] sm:$0xf]
    %v2152 = vld [vmem:[#allocation7 + $0x60] sm:$0xf]
    %v2153 = vld [vmem:[#allocation7 + $0x64] sm:$0xf]
    %v2154 = vld [vmem:[#allocation7 + $0x68] sm:$0xf]
    %v2155 = vld [vmem:[#allocation7 + $0x6c] sm:$0xf]
    %v2156 = vld [vmem:[#allocation7 + $0x70] sm:$0xf]
    %v2157 = vld [vmem:[#allocation7 + $0x74] sm:$0xf]
    %v2158 = vld [vmem:[#allocation7 + $0x78] sm:$0xf]
    %v2159 = vld [vmem:[#allocation7 + $0x7c] sm:$0xf]
    %v2160 = vld [vmem:[#allocation7 + $0x80] sm:$0xf]
    %v2161 = vld [vmem:[#allocation7 + $0x84] sm:$0xf]
    %v2162 = vld [vmem:[#allocation7 + $0x88] sm:$0xf]
    %v2163 = vld [vmem:[#allocation7 + $0x8c] sm:$0xf]
    %v2164 = vld [vmem:[#allocation7 + $0x90] sm:$0xf]
    %v2165 = vld [vmem:[#allocation7 + $0x94] sm:$0xf]
    %v2166 = vld [vmem:[#allocation7 + $0x98] sm:$0xf]
    %v2167 = vld [vmem:[#allocation7 + $0x9c] sm:$0xf]
    %v2168 = vld [vmem:[#allocation7 + $0xa0] sm:$0xf]
    %v2169 = vld [vmem:[#allocation7 + $0xa4] sm:$0xf]
    %v2170 = vld [vmem:[#allocation7 + $0xa8] sm:$0xf]
    %v2171 = vld [vmem:[#allocation7 + $0xac] sm:$0xf]
    %v2172 = vld [vmem:[#allocation7 + $0xb0] sm:$0xf]
    %v2173 = vld [vmem:[#allocation7 + $0xb4] sm:$0xf]
    %v2174 = vld [vmem:[#allocation7 + $0xb8] sm:$0xf]
    %v2175 = vld [vmem:[#allocation7 + $0xbc] sm:$0xf]
    %v2176 = vld [vmem:[#allocation7 + $0xc0] sm:$0xf]
    %v2177 = vld [vmem:[#allocation7 + $0xc4] sm:$0xf]
    %v2178 = vld [vmem:[#allocation7 + $0xc8] sm:$0xf]
    %v2179 = vld [vmem:[#allocation7 + $0xcc] sm:$0xf]
    %v2180 = vld [vmem:[#allocation7 + $0xd0] sm:$0xf]
    %v2181 = vld [vmem:[#allocation7 + $0xd4] sm:$0xf]
    %v2182 = vld [vmem:[#allocation7 + $0xd8] sm:$0xf]
    %v2183 = vld [vmem:[#allocation7 + $0xdc] sm:$0xf]
    %v2184 = vld [vmem:[#allocation7 + $0xe0] sm:$0xf]
    %v2185 = vld [vmem:[#allocation7 + $0xe4] sm:$0xf]
    %v2186 = vld [vmem:[#allocation7 + $0xe8] sm:$0xf]
    %v2187 = vld [vmem:[#allocation7 + $0xec] sm:$0xf]
    %v2188 = vld [vmem:[#allocation7 + $0xf0] sm:$0xf]
    %v2189 = vld [vmem:[#allocation7 + $0xf4] sm:$0xf]
    %v2190 = vld [vmem:[#allocation7 + $0xf8] sm:$0xf]
    %v2191 = vld [vmem:[#allocation7 + $0xfc] sm:$0xf]
    %v2192 = vld [vmem:[%s6] sm:$0x1]
    %v2194 = vlaneseq
    %v2195 = vshrl.u32 %v2194, 7
    %v2196 = vsub.s32 0, %v2195
    %v2197 = vrot.slane %v2192, %v2196
    %v2263 = vunpack.c.l.b16 %v2128
    %v2264 = vunpack.c.l.b16 %v2129
    %v2265 = vunpack.c.l.b16 %v2130
    %v2266 = vunpack.c.l.b16 %v2131
    %v2267 = vunpack.c.l.b16 %v2132
    %v2268 = vunpack.c.l.b16 %v2133
    %v2269 = vunpack.c.l.b16 %v2134
    %v2270 = vunpack.c.l.b16 %v2135
    %v2271 = vunpack.c.l.b16 %v2136
    %v2272 = vunpack.c.l.b16 %v2137
    %v2273 = vunpack.c.l.b16 %v2138
    %v2274 = vunpack.c.l.b16 %v2139
    %v2275 = vunpack.c.l.b16 %v2140
    %v2276 = vunpack.c.l.b16 %v2141
    %v2277 = vunpack.c.l.b16 %v2142
    %v2278 = vunpack.c.l.b16 %v2143
    %v2279 = vunpack.c.l.b16 %v2144
    %v2280 = vunpack.c.l.b16 %v2145
    %v2281 = vunpack.c.l.b16 %v2146
    %v2282 = vunpack.c.l.b16 %v2147
    %v2283 = vunpack.c.l.b16 %v2148
    %v2284 = vunpack.c.l.b16 %v2149
    %v2285 = vunpack.c.l.b16 %v2150
    %v2286 = vunpack.c.l.b16 %v2151
    %v2287 = vunpack.c.l.b16 %v2152
    %v2288 = vunpack.c.l.b16 %v2153
    %v2289 = vunpack.c.l.b16 %v2154
    %v2290 = vunpack.c.l.b16 %v2155
    %v2291 = vunpack.c.l.b16 %v2156
    %v2292 = vunpack.c.l.b16 %v2157
    %v2293 = vunpack.c.l.b16 %v2158
    %v2294 = vunpack.c.l.b16 %v2159
    %v2295 = vunpack.c.l.b16 %v2160
    %v2296 = vunpack.c.l.b16 %v2161
    %v2297 = vunpack.c.l.b16 %v2162
    %v2298 = vunpack.c.l.b16 %v2163
    %v2299 = vunpack.c.l.b16 %v2164
    %v2300 = vunpack.c.l.b16 %v2165
    %v2301 = vunpack.c.l.b16 %v2166
    %v2302 = vunpack.c.l.b16 %v2167
    %v2303 = vunpack.c.l.b16 %v2168
    %v2304 = vunpack.c.l.b16 %v2169
    %v2305 = vunpack.c.l.b16 %v2170
    %v2306 = vunpack.c.l.b16 %v2171
    %v2307 = vunpack.c.l.b16 %v2172
    %v2308 = vunpack.c.l.b16 %v2173
    %v2309 = vunpack.c.l.b16 %v2174
    %v2310 = vunpack.c.l.b16 %v2175
    %v2311 = vunpack.c.l.b16 %v2176
    %v2312 = vunpack.c.l.b16 %v2177
    %v2313 = vunpack.c.l.b16 %v2178
    %v2314 = vunpack.c.l.b16 %v2179
    %v2315 = vunpack.c.l.b16 %v2180
    %v2316 = vunpack.c.l.b16 %v2181
    %v2317 = vunpack.c.l.b16 %v2182
    %v2318 = vunpack.c.l.b16 %v2183
    %v2319 = vunpack.c.l.b16 %v2184
    %v2320 = vunpack.c.l.b16 %v2185
    %v2321 = vunpack.c.l.b16 %v2186
    %v2322 = vunpack.c.l.b16 %v2187
    %v2323 = vunpack.c.l.b16 %v2188
    %v2324 = vunpack.c.l.b16 %v2189
    %v2325 = vunpack.c.l.b16 %v2190
    %v2326 = vunpack.c.l.b16 %v2191
    %v2327 = vpack.c.b16 %v2264, %v2263
    %v2328 = vpack.c.b16 %v2266, %v2265
    %v2329 = vpack.c.b16 %v2268, %v2267
    %v2330 = vpack.c.b16 %v2270, %v2269
    %v2331 = vpack.c.b16 %v2272, %v2271
    %v2332 = vpack.c.b16 %v2274, %v2273
    %v2333 = vpack.c.b16 %v2276, %v2275
    %v2334 = vpack.c.b16 %v2278, %v2277
    %v2335 = vpack.c.b16 %v2280, %v2279
    %v2336 = vpack.c.b16 %v2282, %v2281
    %v2337 = vpack.c.b16 %v2284, %v2283
    %v2338 = vpack.c.b16 %v2286, %v2285
    %v2339 = vpack.c.b16 %v2288, %v2287
    %v2340 = vpack.c.b16 %v2290, %v2289
    %v2341 = vpack.c.b16 %v2292, %v2291
    %v2342 = vpack.c.b16 %v2294, %v2293
    %v2343 = vpack.c.b16 %v2296, %v2295
    %v2344 = vpack.c.b16 %v2298, %v2297
    %v2345 = vpack.c.b16 %v2300, %v2299
    %v2346 = vpack.c.b16 %v2302, %v2301
    %v2347 = vpack.c.b16 %v2304, %v2303
    %v2348 = vpack.c.b16 %v2306, %v2305
    %v2349 = vpack.c.b16 %v2308, %v2307
    %v2350 = vpack.c.b16 %v2310, %v2309
    %v2351 = vpack.c.b16 %v2312, %v2311
    %v2352 = vpack.c.b16 %v2314, %v2313
    %v2353 = vpack.c.b16 %v2316, %v2315
    %v2354 = vpack.c.b16 %v2318, %v2317
    %v2355 = vpack.c.b16 %v2320, %v2319
    %v2356 = vpack.c.b16 %v2322, %v2321
    %v2357 = vpack.c.b16 %v2324, %v2323
    %v2358 = vpack.c.b16 %v2326, %v2325
    %2391 = vmatprep.subr.bf16.mxu0 0
    %2392 = vmatpush1.bf16.msra.mxu0 %v2327
    %2393 = vmatprep.subr.bf16.mxu0 0
    %2394 = vmatpush1.bf16.msra.mxu0 %v2328
    %2395 = vmatprep.subr.bf16.mxu0 0
    %2396 = vmatpush1.bf16.msra.mxu0 %v2329
    %2397 = vmatprep.subr.bf16.mxu0 0
    %2398 = vmatpush1.bf16.msra.mxu0 %v2330
    %2399 = vmatprep.subr.bf16.mxu0 0
    %2400 = vmatpush1.bf16.msra.mxu0 %v2331
    %2401 = vmatprep.subr.bf16.mxu0 0
    %2402 = vmatpush1.bf16.msra.mxu0 %v2332
    %2403 = vmatprep.subr.bf16.mxu0 0
    %2404 = vmatpush1.bf16.msra.mxu0 %v2333
    %2405 = vmatprep.subr.bf16.mxu0 0
    %2406 = vmatpush1.bf16.msra.mxu0 %v2334
    %2407 = vmatprep.subr.bf16.mxu0 0
    %2408 = vmatpush1.bf16.msra.mxu0 %v2335
    %2409 = vmatprep.subr.bf16.mxu0 0
    %2410 = vmatpush1.bf16.msra.mxu0 %v2336
    %2411 = vmatprep.subr.bf16.mxu0 0
    %2412 = vmatpush1.bf16.msra.mxu0 %v2337
    %2413 = vmatprep.subr.bf16.mxu0 0
    %2414 = vmatpush1.bf16.msra.mxu0 %v2338
    %2415 = vmatprep.subr.bf16.mxu0 0
    %2416 = vmatpush1.bf16.msra.mxu0 %v2339
    %2417 = vmatprep.subr.bf16.mxu0 0
    %2418 = vmatpush1.bf16.msra.mxu0 %v2340
    %2419 = vmatprep.subr.bf16.mxu0 0
    %2420 = vmatpush1.bf16.msra.mxu0 %v2341
    %2421 = vmatprep.subr.bf16.mxu0 0
    %2422 = vmatpush1.bf16.msra.mxu0 %v2342
    %2423 = vmatprep.mubr.bf16.mxu0 %v2125
    %2424 = vmatmul.mubr.bf16.gmra.mrb[0].mxu0 %v2124
    %v2425 = vpop.f32.mrb[0].mxu0
    %v2426 = vadd.f32 %v2197, %v2425
    %v2427 = vpop.f32.mrb[0].mxu0
    %v2428 = vpop.f32.mrb[0].mxu0
    %v2429 = vpop.f32.mrb[0].mxu0
    %2430 = vdwg.mxu0
    %2431 = vmatprep.subr.bf16.mxu0 0
    %2432 = vmatpush1.bf16.msra.mxu0 %v2343
    %2433 = vmatprep.subr.bf16.mxu0 0
    %2434 = vmatpush1.bf16.msra.mxu0 %v2344
    %2435 = vmatprep.subr.bf16.mxu0 0
    %2436 = vmatpush1.bf16.msra.mxu0 %v2345
    %2437 = vmatprep.subr.bf16.mxu0 0
    %2438 = vmatpush1.bf16.msra.mxu0 %v2346
    %2439 = vmatprep.subr.bf16.mxu0 0
    %2440 = vmatpush1.bf16.msra.mxu0 %v2347
    %2441 = vmatprep.subr.bf16.mxu0 0
    %2442 = vmatpush1.bf16.msra.mxu0 %v2348
    %2443 = vmatprep.subr.bf16.mxu0 0
    %2444 = vmatpush1.bf16.msra.mxu0 %v2349
    %2445 = vmatprep.subr.bf16.mxu0 0
    %2446 = vmatpush1.bf16.msra.mxu0 %v2350
    %2447 = vmatprep.subr.bf16.mxu0 0
    %2448 = vmatpush1.bf16.msra.mxu0 %v2351
    %2449 = vmatprep.subr.bf16.mxu0 0
    %2450 = vmatpush1.bf16.msra.mxu0 %v2352
    %2451 = vmatprep.subr.bf16.mxu0 0
    %2452 = vmatpush1.bf16.msra.mxu0 %v2353
    %2453 = vmatprep.subr.bf16.mxu0 0
    %2454 = vmatpush1.bf16.msra.mxu0 %v2354
    %2455 = vmatprep.subr.bf16.mxu0 0
    %2456 = vmatpush1.bf16.msra.mxu0 %v2355
    %2457 = vmatprep.subr.bf16.mxu0 0
    %2458 = vmatpush1.bf16.msra.mxu0 %v2356
    %2459 = vmatprep.subr.bf16.mxu0 0
    %2460 = vmatpush1.bf16.msra.mxu0 %v2357
    %2461 = vmatprep.subr.bf16.mxu0 0
    %2462 = vmatpush1.bf16.msra.mxu0 %v2358
    %2463 = vmatprep.mubr.bf16.mxu0 %v2127
    %2464 = vmatmul.mubr.bf16.gmra.mrb[0].mxu0 %v2126
    %v2465 = vpop.f32.mrb[0].mxu0
    %v2466 = vadd.f32 %v2426, %v2465
    %v2467 = vpop.f32.mrb[0].mxu0
    %v2468 = vpop.f32.mrb[0].mxu0
    %v2469 = vpop.f32.mrb[0].mxu0
    %2470 = vdwg.mxu0
    %2471 = vst [vmem:[#allocation8] sm:$0x3] %v2466
    // Predicated region
    $region42: #{tpu_custom_call.1} parent=1 // pred_check
      _
    $region43: #{tpu_custom_call.1} parent=1 // pred_check_branch
      %2473 = sbr.rel (0) target = $region45
    $region44: #{tpu_custom_call.1} parent=1 // pred_region
      %s2475 = ssub.s32 32, 32
      %2476 = vsyncadd [#allocation4], %s2475
      %s2478 = sshll.u32 [#allocation8], 4
      %s2479 = int_to_ptr.vmem [resolvable:$true] %s2478
      %2481 = dma.vmem_to_hbm [thread:$0]  %s2479, 32, %s7, [#allocation4]
    $region45: #{tpu_custom_call.1} parent=1 // pred_fallthru
      _
    // Predicated region
    $region46: #{tpu_custom_call.1} parent=1 // pred_check
      _
    $region47: #{tpu_custom_call.1} parent=1 // pred_check_branch
      %2483 = sbr.rel (0) target = $region49
    $region48: #{tpu_custom_call.1} parent=1 // pred_region
      %2484 = dma.done [#allocation4], 32
    $region49: #{tpu_custom_call.1} parent=1 // pred_fallthru
      _
    %2485 = vsyncpa [#allocation3], 1
    %2486 = vsyncpa [#allocation6], 1
    %2487 = vsyncpa [#allocation4], 1

</llo_original>
